<compile_context>
chip_gen: v7x
topology: tpu7x:2x2x1
jax: 0.10.0
libtpu: 0.0.40
codegen_flags: <defaults>
</compile_context>

<pallas_src>
import functools

import numpy as np

import jax
import jax.numpy as jnp
from jax.experimental import pallas as pl
from jax.experimental.pallas import tpu as pltpu

EPS = 1e-5


# ----------------------------------------------------------------------------
# Small helpers.
# ----------------------------------------------------------------------------
def _pick_lane_tile(hw, target):
    """Largest multiple of 128 that divides hw and is <= target, else hw."""
    t = min(target, hw)
    t -= t % 128
    while t >= 128:
        if hw % t == 0:
            return t
        t -= 128
    return hw            # single full-width tile (always a legal block)


def _vmem_limit(lanes, *chan_widths):
    """Footprint-derived scoped-VMEM request, clamped to a portable range."""
    need = 2 * 4 * lanes * sum(chan_widths) + (8 << 20)    # dbl-buffered f32
    return int(min(64 << 20, max(32 << 20, need)))


def _cp(semantics, lanes, *chan_widths):
    return pltpu.CompilerParams(
        dimension_semantics=semantics,
        vmem_limit_bytes=_vmem_limit(lanes, *chan_widths))


def _bn_finalize(part, gamma, beta, count):
    """Reduce per-block partial (sum, sumsq) to per-channel (scale, shift)."""
    # TODO(synk): E[x^2]-E[x]^2 in f32 can cancel when |mean| >> std; switch
    # to shifted / Welford partials if inputs are not roughly normalized.
    s = part.reshape(-1, part.shape[-2], 2).sum(axis=0)    # (C, 2)
    mu = s[:, 0] / count
    var = s[:, 1] / count - mu * mu
    scale = gamma.reshape(-1) * jax.lax.rsqrt(var + EPS)
    shift = beta.reshape(-1) - mu * scale
    return jnp.stack([scale, shift], axis=1)               # (C, 2)


# ----------------------------------------------------------------------------
# Pass 1: BN1 partial statistics (per-block sum / sum-of-squares).
# ----------------------------------------------------------------------------
def stats_kernel(x_ref, part_ref):
    x = x_ref[0]                                           # (Cin, THW)
    part_ref[0, 0] = jnp.concatenate(
        [jnp.sum(x, axis=1, keepdims=True),
         jnp.sum(x * x, axis=1, keepdims=True)], axis=1)   # (Cin, 2)


# ----------------------------------------------------------------------------
# Pass 2: BN1-apply + ReLU + projection & conv1 matmuls + BN2 partial stats.
# ----------------------------------------------------------------------------
def pre_kernel(x_ref, ss1_ref, wp_ref, w1_ref, sc_ref, t0_ref, part_ref):
    x = x_ref[0]                                           # (Cin, THW)
    y = jnp.maximum(x * ss1_ref[:, 0:1] + ss1_ref[:, 1:2], 0.0)
    yb = y.astype(jnp.bfloat16)
    # Two direct dots (no lane/sublane slicing of a fused result); both
    # outputs are lane-dense (THW lanes).
    sc_ref[0] = jnp.dot(wp_ref[...], yb, preferred_element_type=jnp.float32)
    t0 = jnp.dot(w1_ref[...], yb, preferred_element_type=jnp.float32)
    t0_ref[0] = t0
    part_ref[0, 0] = jnp.concatenate(
        [jnp.sum(t0, axis=1, keepdims=True),
         jnp.sum(t0 * t0, axis=1, keepdims=True)], axis=1)


# ----------------------------------------------------------------------------
# Pass 3: fused BN2-apply + ReLU + q/k/v matmul + ks x ks window attention.
# Window shifts are lane rotations of the (C, HW) slab; out-of-image window
# positions are zeroed with a precomputed {0,1} mask (so they contribute
# exp(q*rel) exactly like the zero-padded unfold).  Energies are computed
# once, cached, and reused by the exp/sum sub-pass.
# ----------------------------------------------------------------------------
def attn_kernel(t0_ref, ss2_ref, wqkv_ref, rel_ref, mask_ref,
                att_ref, part_ref, *, c, ks, pad, width):
    t0 = t0_ref[0]                                         # (C, HW) f32
    t1 = jnp.maximum(t0 * ss2_ref[:, 0:1] + ss2_ref[:, 1:2], 0.0)
    qkv = jnp.dot(wqkv_ref[...], t1.astype(jnp.bfloat16),
                  preferred_element_type=jnp.float32)      # (3C, HW)
    q = qkv[0 * c:1 * c]                                   # sublane-aligned
    k = qkv[1 * c:2 * c]
    v = qkv[2 * c:3 * c]
    hw = q.shape[-1]

    def lane_roll(x, off):
        # bring x[m + off] to lane m (wrap-around is masked out by `mask`)
        if off % hw == 0:
            return x
        s = (-off) % hw
        if hw % 128 == 0:
            return pltpu.roll(x, s, 1)                     # XLU slot
        return jnp.concatenate([x[:, hw - s:], x[:, :hw - s]], axis=1)

    # Sub-pass A: energies of all ks*ks window positions, cached, with the
    # running max for a numerically stable softmax.
    energies = []
    m = None
    for kh in range(ks):
        for kw in range(ks):
            r = kh * ks + kw
            off = (kh - pad) * width + (kw - pad)
            kwin = lane_roll(k, off) * mask_ref[r] + rel_ref[r]
            e = q * kwin
            energies.append(e)
            m = e if m is None else jnp.maximum(m, e)

    # Sub-pass B: exp / sum / weighted-value accumulation; only the cheap
    # XLU roll of v is redone, energies come from the cache.
    s = jnp.zeros_like(q)
    acc = jnp.zeros_like(q)
    for kh in range(ks):
        for kw in range(ks):
            r = kh * ks + kw
            off = (kh - pad) * width + (kw - pad)
            p = jnp.exp(energies[r] - m)
            s = s + p
            acc = acc + p * (lane_roll(v, off) * mask_ref[r])

    att = acc * pl.reciprocal(s, approx=True)              # EUP slot
    att_ref[0] = att
    part_ref[0] = jnp.concatenate(
        [jnp.sum(att, axis=1, keepdims=True),
         jnp.sum(att * att, axis=1, keepdims=True)], axis=1)


# ----------------------------------------------------------------------------
# Pass 4: BN3-apply + ReLU + conv3 matmul + residual add.
# ----------------------------------------------------------------------------
def out_kernel(att_ref, ss3_ref, w3_ref, sc_ref, out_ref):
    a = att_ref[0]                                         # (Cout, THW)
    y = jnp.maximum(a * ss3_ref[:, 0:1] + ss3_ref[:, 1:2], 0.0)
    out_ref[0] = (jnp.dot(w3_ref[...], y.astype(jnp.bfloat16),
                          preferred_element_type=jnp.float32) + sc_ref[0])


# ----------------------------------------------------------------------------
# Wrapper.
# ----------------------------------------------------------------------------
def self_attention_residual_block(x_nchw, params, *, kernel_size=3, padding=1,
                                  lane_tile=2048):
    N, Cin, H, W = x_nchw.shape
    Cout = params["w1"].shape[1]
    Cexp = params["wproj"].shape[1]
    ks = kernel_size
    assert ks - 1 == 2 * padding, "residual add needs 'same' spatial dims"
    HW = H * W
    M = N * HW
    f32, bf16 = jnp.float32, jnp.bfloat16

    # Channel-major view of the NCHW input: (N, Cin, H*W).  Free reshape; no
    # NCHW<->NHWC transpose anywhere in the block.
    x3 = x_nchw.reshape(N, Cin, HW).astype(f32)

    THW = _pick_lane_tile(HW, lane_tile)
    G = HW // THW

    # ---- pass 1: BN1 partial stats ------------------------------------------
    part1 = pl.pallas_call(
        stats_kernel,
        out_shape=jax.ShapeDtypeStruct((N, G, Cin, 2), f32),
        grid=(N, G),
        in_specs=[pl.BlockSpec((1, Cin, THW), lambda n, g: (n, 0, g))],
        out_specs=pl.BlockSpec((1, 1, Cin, 2), lambda n, g: (n, g, 0, 0)),
        compiler_params=_cp(("parallel", "parallel"), THW, Cin),
    )(x3)
    ss1 = _bn_finalize(part1, params["g1"], params["b1"], float(M))

    # ---- pass 2: shortcut + conv1 + BN2 partials -----------------------------
    wp_t = params["wproj"].T.astype(bf16)                  # (Cexp, Cin)
    w1_t = params["w1"].T.astype(bf16)                     # (Cout, Cin)
    sc, t0, part2 = pl.pallas_call(
        pre_kernel,
        out_shape=(jax.ShapeDtypeStruct((N, Cexp, HW), f32),
                   jax.ShapeDtypeStruct((N, Cout, HW), f32),
                   jax.ShapeDtypeStruct((N, G, Cout, 2), f32)),
        grid=(N, G),
        in_specs=[pl.BlockSpec((1, Cin, THW), lambda n, g: (n, 0, g)),
                  pl.BlockSpec((Cin, 2), lambda n, g: (0, 0)),
                  pl.BlockSpec((Cexp, Cin), lambda n, g: (0, 0)),
                  pl.BlockSpec((Cout, Cin), lambda n, g: (0, 0))],
        out_specs=(pl.BlockSpec((1, Cexp, THW), lambda n, g: (n, 0, g)),
                   pl.BlockSpec((1, Cout, THW), lambda n, g: (n, 0, g)),
                   pl.BlockSpec((1, 1, Cout, 2), lambda n, g: (n, g, 0, 0))),
        compiler_params=_cp(("parallel", "parallel"), THW, Cin, Cexp, Cout),
    )(x3, ss1, wp_t, w1_t)
    ss2 = _bn_finalize(part2, params["g2"], params["b2"], float(M))

    # ---- pass 3: fused q/k/v + window attention + BN3 partials ---------------
    wqkv_t = jnp.concatenate([params["wq"], params["wk"], params["wv"]],
                             axis=1).T.astype(bf16)        # (3*Cout, Cout)
    # rel[c, r]: first Cout//2 channels use rel_h[:, kh], second half use
    # rel_w[:, kw], with r = kh*ks + kw (unfold ordering).
    rel = jnp.concatenate([jnp.repeat(params["rel_h"], ks, axis=1),
                           jnp.tile(params["rel_w"], (1, ks))], axis=0)
    rel3 = rel.T[:, :, None].astype(f32)                   # (ks*ks, Cout, 1)

    # Validity mask of each window position for every output pixel (positions
    # falling into the zero padding of the unfold).  Host-side constant.
    hh, ww = np.meshgrid(np.arange(H), np.arange(W), indexing="ij")
    hh = hh.reshape(-1)
    ww = ww.reshape(-1)
    mask_np = np.zeros((ks * ks, 1, HW), np.float32)
    for kh in range(ks):
        for kw in range(ks):
            ok = ((hh + kh - padding >= 0) & (hh + kh - padding < H) &
                  (ww + kw - padding >= 0) & (ww + kw - padding < W))
            mask_np[kh * ks + kw, 0, :] = ok
    mask = jnp.asarray(mask_np)

    # TODO(synk): tile the HW axis with halo bands for very large images so
    # the per-image working set also fits v7x's 64 MiB VMEM.
    att, part3 = pl.pallas_call(
        functools.partial(attn_kernel, c=Cout, ks=ks, pad=padding, width=W),
        out_shape=(jax.ShapeDtypeStruct((N, Cout, HW), f32),
                   jax.ShapeDtypeStruct((N, Cout, 2), f32)),
        grid=(N,),
        in_specs=[pl.BlockSpec((1, Cout, HW), lambda n: (n, 0, 0)),
                  pl.BlockSpec((Cout, 2), lambda n: (0, 0)),
                  pl.BlockSpec((3 * Cout, Cout), lambda n: (0, 0)),
                  pl.BlockSpec((ks * ks, Cout, 1), lambda n: (0, 0, 0)),
                  pl.BlockSpec((ks * ks, 1, HW), lambda n: (0, 0, 0))],
        out_specs=(pl.BlockSpec((1, Cout, HW), lambda n: (n, 0, 0)),
                   pl.BlockSpec((1, Cout, 2), lambda n: (n, 0, 0))),
        compiler_params=_cp(("parallel",), HW, 4 * Cout),
    )(t0, ss2, wqkv_t, rel3, mask)
    ss3 = _bn_finalize(part3, params["g3"], params["b3"], float(M))

    # ---- pass 4: BN3-apply + conv3 + residual --------------------------------
    # TODO(synk): optionally store t0/att as bf16 in HBM (halves DMA on
    # v5e/v6e); kept f32 here to stay close to the f32 reference.
    w3_t = params["w3"].T.astype(bf16)                     # (Cexp, Cout)
    out = pl.pallas_call(
        out_kernel,
        out_shape=jax.ShapeDtypeStruct((N, Cexp, HW), f32),
        grid=(N, G),
        in_specs=[pl.BlockSpec((1, Cout, THW), lambda n, g: (n, 0, g)),
                  pl.BlockSpec((Cout, 2), lambda n, g: (0, 0)),
                  pl.BlockSpec((Cexp, Cout), lambda n, g: (0, 0)),
                  pl.BlockSpec((1, Cexp, THW), lambda n, g: (n, 0, g))],
        out_specs=pl.BlockSpec((1, Cexp, THW), lambda n, g: (n, 0, g)),
        compiler_params=_cp(("parallel", "parallel"), THW, Cout, 2 * Cexp),
    )(att, ss3, w3_t, sc)

    # Output is already channel-major: (N, Cexp, H, W) == NCHW.
    return out.reshape(N, Cexp, H, W)


# ----------------------------------------------------------------------------
# Pure-JAX reference (same math; mirrors the kernel's bf16 MXU operands so the
# tolerance can stay tight -- softmax / BN stay f32 with exact division).
# ----------------------------------------------------------------------------
def _reference(x_nchw, params, kernel_size, padding):
    N, Cin, H, W = x_nchw.shape
    Cout = params["w1"].shape[1]
    Cexp = params["wproj"].shape[1]
    ks = kernel_size
    M = N * H * W

    def bdot(a, b):
        return jnp.dot(a.astype(jnp.bfloat16), b.astype(jnp.bfloat16),
                       preferred_element_type=jnp.float32)

    def bn(x, g, b):
        mu = jnp.mean(x, axis=0, keepdims=True)
        var = jnp.mean((x - mu) ** 2, axis=0, keepdims=True)
        return (x - mu) * jax.lax.rsqrt(var + EPS) * g + b

    x = jnp.transpose(x_nchw, (0, 2, 3, 1)).reshape(M, Cin).astype(jnp.float32)
    y = jnp.maximum(bn(x, params["g1"], params["b1"]), 0.0)
    sc = bdot(y, params["wproj"])
    t = jnp.maximum(bn(bdot(y, params["w1"]), params["g2"], params["b2"]), 0.0)
    q, k, v = bdot(t, params["wq"]), bdot(t, params["wk"]), bdot(t, params["wv"])

    k4 = k.reshape(N, H, W, Cout)
    v4 = v.reshape(N, H, W, Cout)
    padcfg = ((0, 0), (padding, padding), (padding, padding), (0, 0))
    kp, vp = jnp.pad(k4, padcfg), jnp.pad(v4, padcfg)
    kwins, vwins = [], []
    for kh in range(ks):
        for kw in range(ks):
            kwins.append(kp[:, kh:kh + H, kw:kw + W, :])
            vwins.append(vp[:, kh:kh + H, kw:kw + W, :])
    kwin = jnp.stack(kwins, axis=3).reshape(M, ks * ks, Cout)
    vwin = jnp.stack(vwins, axis=3).reshape(M, ks * ks, Cout)
    rel = jnp.concatenate([jnp.repeat(params["rel_h"].T, ks, axis=0),
                           jnp.tile(params["rel_w"].T, (ks, 1))], axis=1)

    energy = q.reshape(M, 1, Cout) * (kwin + rel)
    p = jax.nn.softmax(energy, axis=1)
    att = jnp.sum(p * vwin, axis=1)
    y3 = jnp.maximum(bn(att, params["g3"], params["b3"]), 0.0)
    out = bdot(y3, params["w3"]) + sc
    return jnp.transpose(out.reshape(N, H, W, Cexp), (0, 3, 1, 2))


def init_params(key, in_channels, out_channels, expansion, kernel_size):
    Cexp = out_channels * expansion
    keys = jax.random.split(key, 14)

    def rnd(k, shape, scale=0.2):
        return jax.random.normal(k, shape, dtype=jnp.float32) * scale

    return dict(
        g1=1.0 + rnd(keys[0], (1, in_channels)),
        b1=rnd(keys[1], (1, in_channels)),
        wproj=rnd(keys[2], (in_channels, Cexp)),
        w1=rnd(keys[3], (in_channels, out_channels)),
        g2=1.0 + rnd(keys[4], (1, out_channels)),
        b2=rnd(keys[5], (1, out_channels)),
        wq=rnd(keys[6], (out_channels, out_channels)),
        wk=rnd(keys[7], (out_channels, out_channels)),
        wv=rnd(keys[8], (out_channels, out_channels)),
        rel_h=rnd(keys[9], (out_channels // 2, kernel_size), 1.0),
        rel_w=rnd(keys[10], (out_channels // 2, kernel_size), 1.0),
        g3=1.0 + rnd(keys[11], (1, out_channels)),
        b3=rnd(keys[12], (1, out_channels)),
        w3=rnd(keys[13], (out_channels, Cexp)),
    )


if __name__ == "__main__":
    key = jax.random.PRNGKey(0)
    kx, kparam = jax.random.split(key)

    N, Cin, H, W = 2, 8, 16, 16
    Cout, expansion, ks, pad = 8, 4, 3, 1

    x = jax.random.normal(kx, (N, Cin, H, W), dtype=jnp.float32)
    params = init_params(kparam, Cin, Cout, expansion, ks)

    fwd = jax.jit(functools.partial(self_attention_residual_block,
                                    kernel_size=ks, padding=pad))
    out = jax.block_until_ready(fwd(x, params))
    assert out.shape == (N, Cout * expansion, H, W), out.shape

    ref = _reference(x, params, ks, pad)
    err = float(jnp.max(jnp.abs(out - ref)))
    # bf16 MXU operands (f32 accumulation), approx-EUP reciprocal in the
    # softmax denominator and sum/sum-of-squares BN variance justify the
    # loosened tolerance vs. a bit-exact f32 comparison.
    if err > 3e-2:
        raise SystemExit(f"numerical mismatch: max abs err = {err}")

    print("KERNEL_OK")
</pallas_src>

<mosaic_0001>
module attributes {stable_mosaic.version = 11 : i64} {
  func.func @stats_kernel(%arg0: i32, %arg1: i32, %arg2: memref<1x8x256xf32, #tpu.memory_space<vmem>>, %arg3: memref<1x1x8x2xf32, #tpu.memory_space<vmem>>) attributes {dimension_semantics = [#tpu.dimension_semantics<parallel>, #tpu.dimension_semantics<parallel>], iteration_bounds = array<i64: 2, 1>, scalar_prefetch = 0 : i64, scratch_operands = 0 : i64, tpu.core_type = #tpu.core_type<tc>, window_params = [{transform_indices = @transform_0, window_bounds = array<i64: 1, 8, 256>}, {transform_indices = @transform_1, window_bounds = array<i64: 1, 1, 8, 2>}]} {
    %c0 = arith.constant 0 : index
    %c0_0 = arith.constant 0 : index
    %c0_1 = arith.constant 0 : index
    %0 = vector.load %arg2[%c0, %c0_0, %c0_1] : memref<1x8x256xf32, #tpu.memory_space<vmem>>, vector<1x8x256xf32>
    %1 = vector.shape_cast %0 : vector<1x8x256xf32> to vector<8x256xf32>
    %cst = arith.constant dense<0.000000e+00> : vector<8xf32>
    %2 = vector.multi_reduction <add>, %1, %cst [1] : vector<8x256xf32> to vector<8xf32>
    %3 = vector.shape_cast %2 : vector<8xf32> to vector<8x1xf32>
    %4 = arith.mulf %1, %1 : vector<8x256xf32>
    %cst_2 = arith.constant dense<0.000000e+00> : vector<8xf32>
    %5 = vector.multi_reduction <add>, %4, %cst_2 [1] : vector<8x256xf32> to vector<8xf32>
    %6 = vector.shape_cast %5 : vector<8xf32> to vector<8x1xf32>
    %7 = tpu.concatenate %3, %6 in 1 : vector<8x1xf32>, vector<8x1xf32> -> vector<8x2xf32>
    %c0_3 = arith.constant 0 : index
    %c0_4 = arith.constant 0 : index
    %c0_5 = arith.constant 0 : index
    %c0_6 = arith.constant 0 : index
    %8 = vector.load %arg3[%c0_3, %c0_4, %c0_5, %c0_6] : memref<1x1x8x2xf32, #tpu.memory_space<vmem>>, vector<1x1x8x2xf32>
    %9 = vector.shape_cast %8 : vector<1x1x8x2xf32> to vector<8x2xf32>
    %10 = vector.shape_cast %7 : vector<8x2xf32> to vector<1x1x8x2xf32>
    tpu.vector_store %arg3[%c0_3, %c0_4, %c0_5, %c0_6], %10 {strides = array<i32>} : memref<1x1x8x2xf32, #tpu.memory_space<vmem>>, vector<1x1x8x2xf32>,
    return
  }
  func.func @transform_0(%arg0: i32, %arg1: i32) -> (i32, i32, i32) {
    %c0_i32 = arith.constant 0 : i32
    %c0_i32_0 = arith.constant 0 : i32
    return %arg0, %c0_i32, %arg1 : i32, i32, i32
  }
  func.func @transform_1(%arg0: i32, %arg1: i32) -> (i32, i32, i32, i32) {
    %c0_i32 = arith.constant 0 : i32
    %c0_i32_0 = arith.constant 0 : i32
    %c0_i32_1 = arith.constant 0 : i32
    return %arg0, %arg1, %c0_i32, %c0_i32_0 : i32, i32, i32, i32
  }
}

module attributes {stable_mosaic.version = 11 : i64} {
  func.func @pre_kernel(%arg0: i32, %arg1: i32, %arg2: memref<1x8x256xf32, #tpu.memory_space<vmem>>, %arg3: memref<8x2xf32, #tpu.memory_space<vmem>>, %arg4: memref<32x8xbf16, #tpu.memory_space<vmem>>, %arg5: memref<8x8xbf16, #tpu.memory_space<vmem>>, %arg6: memref<1x32x256xf32, #tpu.memory_space<vmem>>, %arg7: memref<1x8x256xf32, #tpu.memory_space<vmem>>, %arg8: memref<1x1x8x2xf32, #tpu.memory_space<vmem>>) attributes {dimension_semantics = [#tpu.dimension_semantics<parallel>, #tpu.dimension_semantics<parallel>], iteration_bounds = array<i64: 2, 1>, scalar_prefetch = 0 : i64, scratch_operands = 0 : i64, tpu.core_type = #tpu.core_type<tc>, window_params = [{transform_indices = @transform_0, window_bounds = array<i64: 1, 8, 256>}, {pipeline_mode = #tpu.pipeline_mode<synchronous>, transform_indices = @transform_1, window_bounds = array<i64: 8, 2>}, {pipeline_mode = #tpu.pipeline_mode<synchronous>, transform_indices = @transform_2, window_bounds = array<i64: 32, 8>}, {pipeline_mode = #tpu.pipeline_mode<synchronous>, transform_indices = @transform_3, window_bounds = array<i64: 8, 8>}, {transform_indices = @transform_4, window_bounds = array<i64: 1, 32, 256>}, {transform_indices = @transform_5, window_bounds = array<i64: 1, 8, 256>}, {transform_indices = @transform_6, window_bounds = array<i64: 1, 1, 8, 2>}]} {
    %c0 = arith.constant 0 : index
    %c0_0 = arith.constant 0 : index
    %c0_1 = arith.constant 0 : index
    %0 = vector.load %arg2[%c0, %c0_0, %c0_1] : memref<1x8x256xf32, #tpu.memory_space<vmem>>, vector<1x8x256xf32>
    %1 = vector.shape_cast %0 : vector<1x8x256xf32> to vector<8x256xf32>
    %c0_2 = arith.constant 0 : index
    %c0_3 = arith.constant 0 : index
    %2 = vector.load %arg3[%c0_2, %c0_3] : memref<8x2xf32, #tpu.memory_space<vmem>>, vector<8x1xf32>
    %3 = vector.broadcast %2 : vector<8x1xf32> to vector<8x256xf32>
    %4 = arith.mulf %1, %3 : vector<8x256xf32>
    %c0_4 = arith.constant 0 : index
    %c1 = arith.constant 1 : index
    %5 = vector.load %arg3[%c0_4, %c1] : memref<8x2xf32, #tpu.memory_space<vmem>>, vector<8x1xf32>
    %6 = vector.broadcast %5 : vector<8x1xf32> to vector<8x256xf32>
    %7 = arith.addf %4, %6 : vector<8x256xf32>
    %cst = arith.constant 0.000000e+00 : f32
    %8 = vector.broadcast %cst : f32 to vector<8x256xf32>
    %9 = arith.maximumf %7, %8 : vector<8x256xf32>
    %10 = arith.truncf %9 : vector<8x256xf32> to vector<8x256xbf16>
    %c0_5 = arith.constant 0 : index
    %c0_6 = arith.constant 0 : index
    %11 = vector.load %arg4[%c0_5, %c0_6] : memref<32x8xbf16, #tpu.memory_space<vmem>>, vector<32x8xbf16>
    %cst_7 = arith.constant dense<0.000000e+00> : vector<32x256xf32>
    %12 = tpu.matmul %11, %10, %cst_7 {dimension_numbers = #tpu.dot_dimension_numbers<[1], [0], [0], [1], [0, 0, 1, 1], [], []>} : vector<32x8xbf16>, vector<8x256xbf16>, vector<32x256xf32> -> vector<32x256xf32>
    %c0_8 = arith.constant 0 : index
    %c0_9 = arith.constant 0 : index
    %c0_10 = arith.constant 0 : index
    %13 = vector.load %arg6[%c0_8, %c0_9, %c0_10] : memref<1x32x256xf32, #tpu.memory_space<vmem>>, vector<1x32x256xf32>
    %14 = vector.shape_cast %13 : vector<1x32x256xf32> to vector<32x256xf32>
    %15 = vector.shape_cast %12 : vector<32x256xf32> to vector<1x32x256xf32>
    tpu.vector_store %arg6[%c0_8, %c0_9, %c0_10], %15 {strides = array<i32>} : memref<1x32x256xf32, #tpu.memory_space<vmem>>, vector<1x32x256xf32>,
    %c0_11 = arith.constant 0 : index
    %c0_12 = arith.constant 0 : index
    %16 = vector.load %arg5[%c0_11, %c0_12] : memref<8x8xbf16, #tpu.memory_space<vmem>>, vector<8x8xbf16>
    %cst_13 = arith.constant dense<0.000000e+00> : vector<8x256xf32>
    %17 = tpu.matmul %16, %10, %cst_13 {dimension_numbers = #tpu.dot_dimension_numbers<[1], [0], [0], [1], [0, 0, 1, 1], [], []>} : vector<8x8xbf16>, vector<8x256xbf16>, vector<8x256xf32> -> vector<8x256xf32>
    %c0_14 = arith.constant 0 : index
    %c0_15 = arith.constant 0 : index
    %c0_16 = arith.constant 0 : index
    %18 = vector.load %arg7[%c0_14, %c0_15, %c0_16] : memref<1x8x256xf32, #tpu.memory_space<vmem>>, vector<1x8x256xf32>
    %19 = vector.shape_cast %18 : vector<1x8x256xf32> to vector<8x256xf32>
    %20 = vector.shape_cast %17 : vector<8x256xf32> to vector<1x8x256xf32>
    tpu.vector_store %arg7[%c0_14, %c0_15, %c0_16], %20 {strides = array<i32>} : memref<1x8x256xf32, #tpu.memory_space<vmem>>, vector<1x8x256xf32>,
    %cst_17 = arith.constant dense<0.000000e+00> : vector<8xf32>
    %21 = vector.multi_reduction <add>, %17, %cst_17 [1] : vector<8x256xf32> to vector<8xf32>
    %22 = vector.shape_cast %21 : vector<8xf32> to vector<8x1xf32>
    %23 = arith.mulf %17, %17 : vector<8x256xf32>
    %cst_18 = arith.constant dense<0.000000e+00> : vector<8xf32>
    %24 = vector.multi_reduction <add>, %23, %cst_18 [1] : vector<8x256xf32> to vector<8xf32>
    %25 = vector.shape_cast %24 : vector<8xf32> to vector<8x1xf32>
    %26 = tpu.concatenate %22, %25 in 1 : vector<8x1xf32>, vector<8x1xf32> -> vector<8x2xf32>
    %c0_19 = arith.constant 0 : index
    %c0_20 = arith.constant 0 : index
    %c0_21 = arith.constant 0 : index
    %c0_22 = arith.constant 0 : index
    %27 = vector.load %arg8[%c0_19, %c0_20, %c0_21, %c0_22] : memref<1x1x8x2xf32, #tpu.memory_space<vmem>>, vector<1x1x8x2xf32>
    %28 = vector.shape_cast %27 : vector<1x1x8x2xf32> to vector<8x2xf32>
    %29 = vector.shape_cast %26 : vector<8x2xf32> to vector<1x1x8x2xf32>
    tpu.vector_store %arg8[%c0_19, %c0_20, %c0_21, %c0_22], %29 {strides = array<i32>} : memref<1x1x8x2xf32, #tpu.memory_space<vmem>>, vector<1x1x8x2xf32>,
    return
  }
  func.func @transform_0(%arg0: i32, %arg1: i32) -> (i32, i32, i32) {
    %c0_i32 = arith.constant 0 : i32
    %c0_i32_0 = arith.constant 0 : i32
    return %arg0, %c0_i32, %arg1 : i32, i32, i32
  }
  func.func @transform_1(%arg0: i32, %arg1: i32) -> (i32, i32) {
    %c0_i32 = arith.constant 0 : i32
    %c0_i32_0 = arith.constant 0 : i32
    %c0_i32_1 = arith.constant 0 : i32
    return %c0_i32, %c0_i32_0 : i32, i32
  }
  func.func @transform_2(%arg0: i32, %arg1: i32) -> (i32, i32) {
    %c0_i32 = arith.constant 0 : i32
    %c0_i32_0 = arith.constant 0 : i32
    %c0_i32_1 = arith.constant 0 : i32
    return %c0_i32, %c0_i32_0 : i32, i32
  }
  func.func @transform_3(%arg0: i32, %arg1: i32) -> (i32, i32) {
    %c0_i32 = arith.constant 0 : i32
    %c0_i32_0 = arith.constant 0 : i32
    %c0_i32_1 = arith.constant 0 : i32
    return %c0_i32, %c0_i32_0 : i32, i32
  }
  func.func @transform_4(%arg0: i32, %arg1: i32) -> (i32, i32, i32) {
    %c0_i32 = arith.constant 0 : i32
    %c0_i32_0 = arith.constant 0 : i32
    return %arg0, %c0_i32, %arg1 : i32, i32, i32
  }
  func.func @transform_5(%arg0: i32, %arg1: i32) -> (i32, i32, i32) {
    %c0_i32 = arith.constant 0 : i32
    %c0_i32_0 = arith.constant 0 : i32
    return %arg0, %c0_i32, %arg1 : i32, i32, i32
  }
  func.func @transform_6(%arg0: i32, %arg1: i32) -> (i32, i32, i32, i32) {
    %c0_i32 = arith.constant 0 : i32
    %c0_i32_0 = arith.constant 0 : i32
    %c0_i32_1 = arith.constant 0 : i32
    return %arg0, %arg1, %c0_i32, %c0_i32_0 : i32, i32, i32, i32
  }
}

module attributes {stable_mosaic.version = 11 : i64} {
  func.func @attn_kernel(%arg0: i32, %arg1: memref<1x8x256xf32, #tpu.memory_space<vmem>>, %arg2: memref<8x2xf32, #tpu.memory_space<vmem>>, %arg3: memref<24x8xbf16, #tpu.memory_space<vmem>>, %arg4: memref<9x8x1xf32, #tpu.memory_space<vmem>>, %arg5: memref<9x1x256xf32, #tpu.memory_space<vmem>>, %arg6: memref<1x8x256xf32, #tpu.memory_space<vmem>>, %arg7: memref<1x8x2xf32, #tpu.memory_space<vmem>>) attributes {dimension_semantics = [#tpu.dimension_semantics<parallel>], iteration_bounds = array<i64: 2>, scalar_prefetch = 0 : i64, scratch_operands = 0 : i64, tpu.core_type = #tpu.core_type<tc>, window_params = [{transform_indices = @transform_0, window_bounds = array<i64: 1, 8, 256>}, {pipeline_mode = #tpu.pipeline_mode<synchronous>, transform_indices = @transform_1, window_bounds = array<i64: 8, 2>}, {pipeline_mode = #tpu.pipeline_mode<synchronous>, transform_indices = @transform_2, window_bounds = array<i64: 24, 8>}, {pipeline_mode = #tpu.pipeline_mode<synchronous>, transform_indices = @transform_3, window_bounds = array<i64: 9, 8, 1>}, {pipeline_mode = #tpu.pipeline_mode<synchronous>, transform_indices = @transform_4, window_bounds = array<i64: 9, 1, 256>}, {transform_indices = @transform_5, window_bounds = array<i64: 1, 8, 256>}, {transform_indices = @transform_6, window_bounds = array<i64: 1, 8, 2>}]} {
    %c0 = arith.constant 0 : index
    %c0_0 = arith.constant 0 : index
    %c0_1 = arith.constant 0 : index
    %0 = vector.load %arg1[%c0, %c0_0, %c0_1] : memref<1x8x256xf32, #tpu.memory_space<vmem>>, vector<1x8x256xf32>
    %1 = vector.shape_cast %0 : vector<1x8x256xf32> to vector<8x256xf32>
    %c0_2 = arith.constant 0 : index
    %c0_3 = arith.constant 0 : index
    %2 = vector.load %arg2[%c0_2, %c0_3] : memref<8x2xf32, #tpu.memory_space<vmem>>, vector<8x1xf32>
    %3 = vector.broadcast %2 : vector<8x1xf32> to vector<8x256xf32>
    %4 = arith.mulf %1, %3 : vector<8x256xf32>
    %c0_4 = arith.constant 0 : index
    %c1 = arith.constant 1 : index
    %5 = vector.load %arg2[%c0_4, %c1] : memref<8x2xf32, #tpu.memory_space<vmem>>, vector<8x1xf32>
    %6 = vector.broadcast %5 : vector<8x1xf32> to vector<8x256xf32>
    %7 = arith.addf %4, %6 : vector<8x256xf32>
    %cst = arith.constant 0.000000e+00 : f32
    %8 = vector.broadcast %cst : f32 to vector<8x256xf32>
    %9 = arith.maximumf %7, %8 : vector<8x256xf32>
    %c0_5 = arith.constant 0 : index
    %c0_6 = arith.constant 0 : index
    %10 = vector.load %arg3[%c0_5, %c0_6] : memref<24x8xbf16, #tpu.memory_space<vmem>>, vector<24x8xbf16>
    %11 = arith.truncf %9 : vector<8x256xf32> to vector<8x256xbf16>
    %cst_7 = arith.constant dense<0.000000e+00> : vector<24x256xf32>
    %12 = tpu.matmul %10, %11, %cst_7 {dimension_numbers = #tpu.dot_dimension_numbers<[1], [0], [0], [1], [0, 0, 1, 1], [], []>} : vector<24x8xbf16>, vector<8x256xbf16>, vector<24x256xf32> -> vector<24x256xf32>
    %13 = vector.extract_strided_slice %12 {offsets = [0, 0], sizes = [8, 256], strides = [1, 1]} : vector<24x256xf32> to vector<8x256xf32>
    %14 = vector.extract_strided_slice %12 {offsets = [8, 0], sizes = [8, 256], strides = [1, 1]} : vector<24x256xf32> to vector<8x256xf32>
    %15 = vector.extract_strided_slice %12 {offsets = [16, 0], sizes = [8, 256], strides = [1, 1]} : vector<24x256xf32> to vector<8x256xf32>
    %c17_i32 = arith.constant 17 : i32
    %16 = tpu.dynamic_rotate %14 by %c17_i32 dim 1 : vector<8x256xf32>, i32 -> vector<8x256xf32>
    %c0_8 = arith.constant 0 : index
    %c0_9 = arith.constant 0 : index
    %c0_10 = arith.constant 0 : index
    %17 = vector.load %arg5[%c0_8, %c0_9, %c0_10] : memref<9x1x256xf32, #tpu.memory_space<vmem>>, vector<1x1x256xf32>
    %18 = vector.shape_cast %17 : vector<1x1x256xf32> to vector<1x256xf32>
    %19 = vector.broadcast %18 : vector<1x256xf32> to vector<8x256xf32>
    %20 = arith.mulf %16, %19 : vector<8x256xf32>
    %c0_11 = arith.constant 0 : index
    %c0_12 = arith.constant 0 : index
    %c0_13 = arith.constant 0 : index
    %21 = vector.load %arg4[%c0_11, %c0_12, %c0_13] : memref<9x8x1xf32, #tpu.memory_space<vmem>>, vector<1x8x1xf32>
    %22 = vector.shape_cast %21 : vector<1x8x1xf32> to vector<8x1xf32>
    %23 = vector.broadcast %22 : vector<8x1xf32> to vector<8x256xf32>
    %24 = arith.addf %20, %23 : vector<8x256xf32>
    %25 = arith.mulf %13, %24 : vector<8x256xf32>
    %c16_i32 = arith.constant 16 : i32
    %26 = tpu.dynamic_rotate %14 by %c16_i32 dim 1 : vector<8x256xf32>, i32 -> vector<8x256xf32>
    %c1_14 = arith.constant 1 : index
    %c0_15 = arith.constant 0 : index
    %c0_16 = arith.constant 0 : index
    %27 = vector.load %arg5[%c1_14, %c0_15, %c0_16] : memref<9x1x256xf32, #tpu.memory_space<vmem>>, vector<1x1x256xf32>
    %28 = vector.shape_cast %27 : vector<1x1x256xf32> to vector<1x256xf32>
    %29 = vector.broadcast %28 : vector<1x256xf32> to vector<8x256xf32>
    %30 = arith.mulf %26, %29 : vector<8x256xf32>
    %c1_17 = arith.constant 1 : index
    %c0_18 = arith.constant 0 : index
    %c0_19 = arith.constant 0 : index
    %31 = vector.load %arg4[%c1_17, %c0_18, %c0_19] : memref<9x8x1xf32, #tpu.memory_space<vmem>>, vector<1x8x1xf32>
    %32 = vector.shape_cast %31 : vector<1x8x1xf32> to vector<8x1xf32>
    %33 = vector.broadcast %32 : vector<8x1xf32> to vector<8x256xf32>
    %34 = arith.addf %30, %33 : vector<8x256xf32>
    %35 = arith.mulf %13, %34 : vector<8x256xf32>
    %36 = arith.maximumf %25, %35 : vector<8x256xf32>
    %c15_i32 = arith.constant 15 : i32
    %37 = tpu.dynamic_rotate %14 by %c15_i32 dim 1 : vector<8x256xf32>, i32 -> vector<8x256xf32>
    %c2 = arith.constant 2 : index
    %c0_20 = arith.constant 0 : index
    %c0_21 = arith.constant 0 : index
    %38 = vector.load %arg5[%c2, %c0_20, %c0_21] : memref<9x1x256xf32, #tpu.memory_space<vmem>>, vector<1x1x256xf32>
    %39 = vector.shape_cast %38 : vector<1x1x256xf32> to vector<1x256xf32>
    %40 = vector.broadcast %39 : vector<1x256xf32> to vector<8x256xf32>
    %41 = arith.mulf %37, %40 : vector<8x256xf32>
    %c2_22 = arith.constant 2 : index
    %c0_23 = arith.constant 0 : index
    %c0_24 = arith.constant 0 : index
    %42 = vector.load %arg4[%c2_22, %c0_23, %c0_24] : memref<9x8x1xf32, #tpu.memory_space<vmem>>, vector<1x8x1xf32>
    %43 = vector.shape_cast %42 : vector<1x8x1xf32> to vector<8x1xf32>
    %44 = vector.broadcast %43 : vector<8x1xf32> to vector<8x256xf32>
    %45 = arith.addf %41, %44 : vector<8x256xf32>
    %46 = arith.mulf %13, %45 : vector<8x256xf32>
    %47 = arith.maximumf %36, %46 : vector<8x256xf32>
    %c1_i32 = arith.constant 1 : i32
    %48 = tpu.dynamic_rotate %14 by %c1_i32 dim 1 : vector<8x256xf32>, i32 -> vector<8x256xf32>
    %c3 = arith.constant 3 : index
    %c0_25 = arith.constant 0 : index
    %c0_26 = arith.constant 0 : index
    %49 = vector.load %arg5[%c3, %c0_25, %c0_26] : memref<9x1x256xf32, #tpu.memory_space<vmem>>, vector<1x1x256xf32>
    %50 = vector.shape_cast %49 : vector<1x1x256xf32> to vector<1x256xf32>
    %51 = vector.broadcast %50 : vector<1x256xf32> to vector<8x256xf32>
    %52 = arith.mulf %48, %51 : vector<8x256xf32>
    %c3_27 = arith.constant 3 : index
    %c0_28 = arith.constant 0 : index
    %c0_29 = arith.constant 0 : index
    %53 = vector.load %arg4[%c3_27, %c0_28, %c0_29] : memref<9x8x1xf32, #tpu.memory_space<vmem>>, vector<1x8x1xf32>
    %54 = vector.shape_cast %53 : vector<1x8x1xf32> to vector<8x1xf32>
    %55 = vector.broadcast %54 : vector<8x1xf32> to vector<8x256xf32>
    %56 = arith.addf %52, %55 : vector<8x256xf32>
    %57 = arith.mulf %13, %56 : vector<8x256xf32>
    %58 = arith.maximumf %47, %57 : vector<8x256xf32>
    %c4 = arith.constant 4 : index
    %c0_30 = arith.constant 0 : index
    %c0_31 = arith.constant 0 : index
    %59 = vector.load %arg5[%c4, %c0_30, %c0_31] : memref<9x1x256xf32, #tpu.memory_space<vmem>>, vector<1x1x256xf32>
    %60 = vector.shape_cast %59 : vector<1x1x256xf32> to vector<1x256xf32>
    %61 = vector.broadcast %60 : vector<1x256xf32> to vector<8x256xf32>
    %62 = arith.mulf %14, %61 : vector<8x256xf32>
    %c4_32 = arith.constant 4 : index
    %c0_33 = arith.constant 0 : index
    %c0_34 = arith.constant 0 : index
    %63 = vector.load %arg4[%c4_32, %c0_33, %c0_34] : memref<9x8x1xf32, #tpu.memory_space<vmem>>, vector<1x8x1xf32>
    %64 = vector.shape_cast %63 : vector<1x8x1xf32> to vector<8x1xf32>
    %65 = vector.broadcast %64 : vector<8x1xf32> to vector<8x256xf32>
    %66 = arith.addf %62, %65 : vector<8x256xf32>
    %67 = arith.mulf %13, %66 : vector<8x256xf32>
    %68 = arith.maximumf %58, %67 : vector<8x256xf32>
    %c255_i32 = arith.constant 255 : i32
    %69 = tpu.dynamic_rotate %14 by %c255_i32 dim 1 : vector<8x256xf32>, i32 -> vector<8x256xf32>
    %c5 = arith.constant 5 : index
    %c0_35 = arith.constant 0 : index
    %c0_36 = arith.constant 0 : index
    %70 = vector.load %arg5[%c5, %c0_35, %c0_36] : memref<9x1x256xf32, #tpu.memory_space<vmem>>, vector<1x1x256xf32>
    %71 = vector.shape_cast %70 : vector<1x1x256xf32> to vector<1x256xf32>
    %72 = vector.broadcast %71 : vector<1x256xf32> to vector<8x256xf32>
    %73 = arith.mulf %69, %72 : vector<8x256xf32>
    %c5_37 = arith.constant 5 : index
    %c0_38 = arith.constant 0 : index
    %c0_39 = arith.constant 0 : index
    %74 = vector.load %arg4[%c5_37, %c0_38, %c0_39] : memref<9x8x1xf32, #tpu.memory_space<vmem>>, vector<1x8x1xf32>
    %75 = vector.shape_cast %74 : vector<1x8x1xf32> to vector<8x1xf32>
    %76 = vector.broadcast %75 : vector<8x1xf32> to vector<8x256xf32>
    %77 = arith.addf %73, %76 : vector<8x256xf32>
    %78 = arith.mulf %13, %77 : vector<8x256xf32>
    %79 = arith.maximumf %68, %78 : vector<8x256xf32>
    %c241_i32 = arith.constant 241 : i32
    %80 = tpu.dynamic_rotate %14 by %c241_i32 dim 1 : vector<8x256xf32>, i32 -> vector<8x256xf32>
    %c6 = arith.constant 6 : index
    %c0_40 = arith.constant 0 : index
    %c0_41 = arith.constant 0 : index
    %81 = vector.load %arg5[%c6, %c0_40, %c0_41] : memref<9x1x256xf32, #tpu.memory_space<vmem>>, vector<1x1x256xf32>
    %82 = vector.shape_cast %81 : vector<1x1x256xf32> to vector<1x256xf32>
    %83 = vector.broadcast %82 : vector<1x256xf32> to vector<8x256xf32>
    %84 = arith.mulf %80, %83 : vector<8x256xf32>
    %c6_42 = arith.constant 6 : index
    %c0_43 = arith.constant 0 : index
    %c0_44 = arith.constant 0 : index
    %85 = vector.load %arg4[%c6_42, %c0_43, %c0_44] : memref<9x8x1xf32, #tpu.memory_space<vmem>>, vector<1x8x1xf32>
    %86 = vector.shape_cast %85 : vector<1x8x1xf32> to vector<8x1xf32>
    %87 = vector.broadcast %86 : vector<8x1xf32> to vector<8x256xf32>
    %88 = arith.addf %84, %87 : vector<8x256xf32>
    %89 = arith.mulf %13, %88 : vector<8x256xf32>
    %90 = arith.maximumf %79, %89 : vector<8x256xf32>
    %c240_i32 = arith.constant 240 : i32
    %91 = tpu.dynamic_rotate %14 by %c240_i32 dim 1 : vector<8x256xf32>, i32 -> vector<8x256xf32>
    %c7 = arith.constant 7 : index
    %c0_45 = arith.constant 0 : index
    %c0_46 = arith.constant 0 : index
    %92 = vector.load %arg5[%c7, %c0_45, %c0_46] : memref<9x1x256xf32, #tpu.memory_space<vmem>>, vector<1x1x256xf32>
    %93 = vector.shape_cast %92 : vector<1x1x256xf32> to vector<1x256xf32>
    %94 = vector.broadcast %93 : vector<1x256xf32> to vector<8x256xf32>
    %95 = arith.mulf %91, %94 : vector<8x256xf32>
    %c7_47 = arith.constant 7 : index
    %c0_48 = arith.constant 0 : index
    %c0_49 = arith.constant 0 : index
    %96 = vector.load %arg4[%c7_47, %c0_48, %c0_49] : memref<9x8x1xf32, #tpu.memory_space<vmem>>, vector<1x8x1xf32>
    %97 = vector.shape_cast %96 : vector<1x8x1xf32> to vector<8x1xf32>
    %98 = vector.broadcast %97 : vector<8x1xf32> to vector<8x256xf32>
    %99 = arith.addf %95, %98 : vector<8x256xf32>
    %100 = arith.mulf %13, %99 : vector<8x256xf32>
    %101 = arith.maximumf %90, %100 : vector<8x256xf32>
    %c239_i32 = arith.constant 239 : i32
    %102 = tpu.dynamic_rotate %14 by %c239_i32 dim 1 : vector<8x256xf32>, i32 -> vector<8x256xf32>
    %c8 = arith.constant 8 : index
    %c0_50 = arith.constant 0 : index
    %c0_51 = arith.constant 0 : index
    %103 = vector.load %arg5[%c8, %c0_50, %c0_51] : memref<9x1x256xf32, #tpu.memory_space<vmem>>, vector<1x1x256xf32>
    %104 = vector.shape_cast %103 : vector<1x1x256xf32> to vector<1x256xf32>
    %105 = vector.broadcast %104 : vector<1x256xf32> to vector<8x256xf32>
    %106 = arith.mulf %102, %105 : vector<8x256xf32>
    %c8_52 = arith.constant 8 : index
    %c0_53 = arith.constant 0 : index
    %c0_54 = arith.constant 0 : index
    %107 = vector.load %arg4[%c8_52, %c0_53, %c0_54] : memref<9x8x1xf32, #tpu.memory_space<vmem>>, vector<1x8x1xf32>
    %108 = vector.shape_cast %107 : vector<1x8x1xf32> to vector<8x1xf32>
    %109 = vector.broadcast %108 : vector<8x1xf32> to vector<8x256xf32>
    %110 = arith.addf %106, %109 : vector<8x256xf32>
    %111 = arith.mulf %13, %110 : vector<8x256xf32>
    %112 = arith.maximumf %101, %111 : vector<8x256xf32>
    %cst_55 = arith.constant 0.000000e+00 : f32
    %113 = vector.broadcast %cst_55 : f32 to vector<8x256xf32>
    %cst_56 = arith.constant 0.000000e+00 : f32
    %114 = vector.broadcast %cst_56 : f32 to vector<8x256xf32>
    %115 = arith.subf %25, %112 : vector<8x256xf32>
    %116 = math.exp %115 : vector<8x256xf32>
    %117 = arith.addf %113, %116 : vector<8x256xf32>
    %c17_i32_57 = arith.constant 17 : i32
    %118 = tpu.dynamic_rotate %15 by %c17_i32_57 dim 1 : vector<8x256xf32>, i32 -> vector<8x256xf32>
    %c0_58 = arith.constant 0 : index
    %c0_59 = arith.constant 0 : index
    %c0_60 = arith.constant 0 : index
    %119 = vector.load %arg5[%c0_58, %c0_59, %c0_60] : memref<9x1x256xf32, #tpu.memory_space<vmem>>, vector<1x1x256xf32>
    %120 = vector.shape_cast %119 : vector<1x1x256xf32> to vector<1x256xf32>
    %121 = vector.broadcast %120 : vector<1x256xf32> to vector<8x256xf32>
    %122 = arith.mulf %118, %121 : vector<8x256xf32>
    %123 = arith.mulf %116, %122 : vector<8x256xf32>
    %124 = arith.addf %114, %123 : vector<8x256xf32>
    %125 = arith.subf %35, %112 : vector<8x256xf32>
    %126 = math.exp %125 : vector<8x256xf32>
    %127 = arith.addf %117, %126 : vector<8x256xf32>
    %c16_i32_61 = arith.constant 16 : i32
    %128 = tpu.dynamic_rotate %15 by %c16_i32_61 dim 1 : vector<8x256xf32>, i32 -> vector<8x256xf32>
    %c1_62 = arith.constant 1 : index
    %c0_63 = arith.constant 0 : index
    %c0_64 = arith.constant 0 : index
    %129 = vector.load %arg5[%c1_62, %c0_63, %c0_64] : memref<9x1x256xf32, #tpu.memory_space<vmem>>, vector<1x1x256xf32>
    %130 = vector.shape_cast %129 : vector<1x1x256xf32> to vector<1x256xf32>
    %131 = vector.broadcast %130 : vector<1x256xf32> to vector<8x256xf32>
    %132 = arith.mulf %128, %131 : vector<8x256xf32>
    %133 = arith.mulf %126, %132 : vector<8x256xf32>
    %134 = arith.addf %124, %133 : vector<8x256xf32>
    %135 = arith.subf %46, %112 : vector<8x256xf32>
    %136 = math.exp %135 : vector<8x256xf32>
    %137 = arith.addf %127, %136 : vector<8x256xf32>
    %c15_i32_65 = arith.constant 15 : i32
    %138 = tpu.dynamic_rotate %15 by %c15_i32_65 dim 1 : vector<8x256xf32>, i32 -> vector<8x256xf32>
    %c2_66 = arith.constant 2 : index
    %c0_67 = arith.constant 0 : index
    %c0_68 = arith.constant 0 : index
    %139 = vector.load %arg5[%c2_66, %c0_67, %c0_68] : memref<9x1x256xf32, #tpu.memory_space<vmem>>, vector<1x1x256xf32>
    %140 = vector.shape_cast %139 : vector<1x1x256xf32> to vector<1x256xf32>
    %141 = vector.broadcast %140 : vector<1x256xf32> to vector<8x256xf32>
    %142 = arith.mulf %138, %141 : vector<8x256xf32>
    %143 = arith.mulf %136, %142 : vector<8x256xf32>
    %144 = arith.addf %134, %143 : vector<8x256xf32>
    %145 = arith.subf %57, %112 : vector<8x256xf32>
    %146 = math.exp %145 : vector<8x256xf32>
    %147 = arith.addf %137, %146 : vector<8x256xf32>
    %c1_i32_69 = arith.constant 1 : i32
    %148 = tpu.dynamic_rotate %15 by %c1_i32_69 dim 1 : vector<8x256xf32>, i32 -> vector<8x256xf32>
    %c3_70 = arith.constant 3 : index
    %c0_71 = arith.constant 0 : index
    %c0_72 = arith.constant 0 : index
    %149 = vector.load %arg5[%c3_70, %c0_71, %c0_72] : memref<9x1x256xf32, #tpu.memory_space<vmem>>, vector<1x1x256xf32>
    %150 = vector.shape_cast %149 : vector<1x1x256xf32> to vector<1x256xf32>
    %151 = vector.broadcast %150 : vector<1x256xf32> to vector<8x256xf32>
    %152 = arith.mulf %148, %151 : vector<8x256xf32>
    %153 = arith.mulf %146, %152 : vector<8x256xf32>
    %154 = arith.addf %144, %153 : vector<8x256xf32>
    %155 = arith.subf %67, %112 : vector<8x256xf32>
    %156 = math.exp %155 : vector<8x256xf32>
    %157 = arith.addf %147, %156 : vector<8x256xf32>
    %c4_73 = arith.constant 4 : index
    %c0_74 = arith.constant 0 : index
    %c0_75 = arith.constant 0 : index
    %158 = vector.load %arg5[%c4_73, %c0_74, %c0_75] : memref<9x1x256xf32, #tpu.memory_space<vmem>>, vector<1x1x256xf32>
    %159 = vector.shape_cast %158 : vector<1x1x256xf32> to vector<1x256xf32>
    %160 = vector.broadcast %159 : vector<1x256xf32> to vector<8x256xf32>
    %161 = arith.mulf %15, %160 : vector<8x256xf32>
    %162 = arith.mulf %156, %161 : vector<8x256xf32>
    %163 = arith.addf %154, %162 : vector<8x256xf32>
    %164 = arith.subf %78, %112 : vector<8x256xf32>
    %165 = math.exp %164 : vector<8x256xf32>
    %166 = arith.addf %157, %165 : vector<8x256xf32>
    %c255_i32_76 = arith.constant 255 : i32
    %167 = tpu.dynamic_rotate %15 by %c255_i32_76 dim 1 : vector<8x256xf32>, i32 -> vector<8x256xf32>
    %c5_77 = arith.constant 5 : index
    %c0_78 = arith.constant 0 : index
    %c0_79 = arith.constant 0 : index
    %168 = vector.load %arg5[%c5_77, %c0_78, %c0_79] : memref<9x1x256xf32, #tpu.memory_space<vmem>>, vector<1x1x256xf32>
    %169 = vector.shape_cast %168 : vector<1x1x256xf32> to vector<1x256xf32>
    %170 = vector.broadcast %169 : vector<1x256xf32> to vector<8x256xf32>
    %171 = arith.mulf %167, %170 : vector<8x256xf32>
    %172 = arith.mulf %165, %171 : vector<8x256xf32>
    %173 = arith.addf %163, %172 : vector<8x256xf32>
    %174 = arith.subf %89, %112 : vector<8x256xf32>
    %175 = math.exp %174 : vector<8x256xf32>
    %176 = arith.addf %166, %175 : vector<8x256xf32>
    %c241_i32_80 = arith.constant 241 : i32
    %177 = tpu.dynamic_rotate %15 by %c241_i32_80 dim 1 : vector<8x256xf32>, i32 -> vector<8x256xf32>
    %c6_81 = arith.constant 6 : index
    %c0_82 = arith.constant 0 : index
    %c0_83 = arith.constant 0 : index
    %178 = vector.load %arg5[%c6_81, %c0_82, %c0_83] : memref<9x1x256xf32, #tpu.memory_space<vmem>>, vector<1x1x256xf32>
    %179 = vector.shape_cast %178 : vector<1x1x256xf32> to vector<1x256xf32>
    %180 = vector.broadcast %179 : vector<1x256xf32> to vector<8x256xf32>
    %181 = arith.mulf %177, %180 : vector<8x256xf32>
    %182 = arith.mulf %175, %181 : vector<8x256xf32>
    %183 = arith.addf %173, %182 : vector<8x256xf32>
    %184 = arith.subf %100, %112 : vector<8x256xf32>
    %185 = math.exp %184 : vector<8x256xf32>
    %186 = arith.addf %176, %185 : vector<8x256xf32>
    %c240_i32_84 = arith.constant 240 : i32
    %187 = tpu.dynamic_rotate %15 by %c240_i32_84 dim 1 : vector<8x256xf32>, i32 -> vector<8x256xf32>
    %c7_85 = arith.constant 7 : index
    %c0_86 = arith.constant 0 : index
    %c0_87 = arith.constant 0 : index
    %188 = vector.load %arg5[%c7_85, %c0_86, %c0_87] : memref<9x1x256xf32, #tpu.memory_space<vmem>>, vector<1x1x256xf32>
    %189 = vector.shape_cast %188 : vector<1x1x256xf32> to vector<1x256xf32>
    %190 = vector.broadcast %189 : vector<1x256xf32> to vector<8x256xf32>
    %191 = arith.mulf %187, %190 : vector<8x256xf32>
    %192 = arith.mulf %185, %191 : vector<8x256xf32>
    %193 = arith.addf %183, %192 : vector<8x256xf32>
    %194 = arith.subf %111, %112 : vector<8x256xf32>
    %195 = math.exp %194 : vector<8x256xf32>
    %196 = arith.addf %186, %195 : vector<8x256xf32>
    %c239_i32_88 = arith.constant 239 : i32
    %197 = tpu.dynamic_rotate %15 by %c239_i32_88 dim 1 : vector<8x256xf32>, i32 -> vector<8x256xf32>
    %c8_89 = arith.constant 8 : index
    %c0_90 = arith.constant 0 : index
    %c0_91 = arith.constant 0 : index
    %198 = vector.load %arg5[%c8_89, %c0_90, %c0_91] : memref<9x1x256xf32, #tpu.memory_space<vmem>>, vector<1x1x256xf32>
    %199 = vector.shape_cast %198 : vector<1x1x256xf32> to vector<1x256xf32>
    %200 = vector.broadcast %199 : vector<1x256xf32> to vector<8x256xf32>
    %201 = arith.mulf %197, %200 : vector<8x256xf32>
    %202 = arith.mulf %195, %201 : vector<8x256xf32>
    %203 = arith.addf %193, %202 : vector<8x256xf32>
    %204 = tpu.reciprocal %196 {approx = true} : vector<8x256xf32> -> vector<8x256xf32>
    %205 = arith.mulf %203, %204 : vector<8x256xf32>
    %c0_92 = arith.constant 0 : index
    %c0_93 = arith.constant 0 : index
    %c0_94 = arith.constant 0 : index
    %206 = vector.load %arg6[%c0_92, %c0_93, %c0_94] : memref<1x8x256xf32, #tpu.memory_space<vmem>>, vector<1x8x256xf32>
    %207 = vector.shape_cast %206 : vector<1x8x256xf32> to vector<8x256xf32>
    %208 = vector.shape_cast %205 : vector<8x256xf32> to vector<1x8x256xf32>
    tpu.vector_store %arg6[%c0_92, %c0_93, %c0_94], %208 {strides = array<i32>} : memref<1x8x256xf32, #tpu.memory_space<vmem>>, vector<1x8x256xf32>,
    %cst_95 = arith.constant dense<0.000000e+00> : vector<8xf32>
    %209 = vector.multi_reduction <add>, %205, %cst_95 [1] : vector<8x256xf32> to vector<8xf32>
    %210 = vector.shape_cast %209 : vector<8xf32> to vector<8x1xf32>
    %211 = arith.mulf %205, %205 : vector<8x256xf32>
    %cst_96 = arith.constant dense<0.000000e+00> : vector<8xf32>
    %212 = vector.multi_reduction <add>, %211, %cst_96 [1] : vector<8x256xf32> to vector<8xf32>
    %213 = vector.shape_cast %212 : vector<8xf32> to vector<8x1xf32>
    %214 = tpu.concatenate %210, %213 in 1 : vector<8x1xf32>, vector<8x1xf32> -> vector<8x2xf32>
    %c0_97 = arith.constant 0 : index
    %c0_98 = arith.constant 0 : index
    %c0_99 = arith.constant 0 : index
    %215 = vector.load %arg7[%c0_97, %c0_98, %c0_99] : memref<1x8x2xf32, #tpu.memory_space<vmem>>, vector<1x8x2xf32>
    %216 = vector.shape_cast %215 : vector<1x8x2xf32> to vector<8x2xf32>
    %217 = vector.shape_cast %214 : vector<8x2xf32> to vector<1x8x2xf32>
    tpu.vector_store %arg7[%c0_97, %c0_98, %c0_99], %217 {strides = array<i32>} : memref<1x8x2xf32, #tpu.memory_space<vmem>>, vector<1x8x2xf32>,
    return
  }
  func.func @transform_0(%arg0: i32) -> (i32, i32, i32) {
    %c0_i32 = arith.constant 0 : i32
    %c0_i32_0 = arith.constant 0 : i32
    %c0_i32_1 = arith.constant 0 : i32
    return %arg0, %c0_i32, %c0_i32_0 : i32, i32, i32
  }
  func.func @transform_1(%arg0: i32) -> (i32, i32) {
    %c0_i32 = arith.constant 0 : i32
    %c0_i32_0 = arith.constant 0 : i32
    %c0_i32_1 = arith.constant 0 : i32
    return %c0_i32, %c0_i32_0 : i32, i32
  }
  func.func @transform_2(%arg0: i32) -> (i32, i32) {
    %c0_i32 = arith.constant 0 : i32
    %c0_i32_0 = arith.constant 0 : i32
    %c0_i32_1 = arith.constant 0 : i32
    return %c0_i32, %c0_i32_0 : i32, i32
  }
  func.func @transform_3(%arg0: i32) -> (i32, i32, i32) {
    %c0_i32 = arith.constant 0 : i32
    %c0_i32_0 = arith.constant 0 : i32
    %c0_i32_1 = arith.constant 0 : i32
    %c0_i32_2 = arith.constant 0 : i32
    return %c0_i32, %c0_i32_0, %c0_i32_1 : i32, i32, i32
  }
  func.func @transform_4(%arg0: i32) -> (i32, i32, i32) {
    %c0_i32 = arith.constant 0 : i32
    %c0_i32_0 = arith.constant 0 : i32
    %c0_i32_1 = arith.constant 0 : i32
    %c0_i32_2 = arith.constant 0 : i32
    return %c0_i32, %c0_i32_0, %c0_i32_1 : i32, i32, i32
  }
  func.func @transform_5(%arg0: i32) -> (i32, i32, i32) {
    %c0_i32 = arith.constant 0 : i32
    %c0_i32_0 = arith.constant 0 : i32
    %c0_i32_1 = arith.constant 0 : i32
    return %arg0, %c0_i32, %c0_i32_0 : i32, i32, i32
  }
  func.func @transform_6(%arg0: i32) -> (i32, i32, i32) {
    %c0_i32 = arith.constant 0 : i32
    %c0_i32_0 = arith.constant 0 : i32
    %c0_i32_1 = arith.constant 0 : i32
    return %arg0, %c0_i32, %c0_i32_0 : i32, i32, i32
  }
}

module attributes {stable_mosaic.version = 11 : i64} {
  func.func @out_kernel(%arg0: i32, %arg1: i32, %arg2: memref<1x8x256xf32, #tpu.memory_space<vmem>>, %arg3: memref<8x2xf32, #tpu.memory_space<vmem>>, %arg4: memref<32x8xbf16, #tpu.memory_space<vmem>>, %arg5: memref<1x32x256xf32, #tpu.memory_space<vmem>>, %arg6: memref<1x32x256xf32, #tpu.memory_space<vmem>>) attributes {dimension_semantics = [#tpu.dimension_semantics<parallel>, #tpu.dimension_semantics<parallel>], iteration_bounds = array<i64: 2, 1>, scalar_prefetch = 0 : i64, scratch_operands = 0 : i64, tpu.core_type = #tpu.core_type<tc>, window_params = [{transform_indices = @transform_0, window_bounds = array<i64: 1, 8, 256>}, {pipeline_mode = #tpu.pipeline_mode<synchronous>, transform_indices = @transform_1, window_bounds = array<i64: 8, 2>}, {pipeline_mode = #tpu.pipeline_mode<synchronous>, transform_indices = @transform_2, window_bounds = array<i64: 32, 8>}, {transform_indices = @transform_3, window_bounds = array<i64: 1, 32, 256>}, {transform_indices = @transform_4, window_bounds = array<i64: 1, 32, 256>}]} {
    %c0 = arith.constant 0 : index
    %c0_0 = arith.constant 0 : index
    %c0_1 = arith.constant 0 : index
    %0 = vector.load %arg2[%c0, %c0_0, %c0_1] : memref<1x8x256xf32, #tpu.memory_space<vmem>>, vector<1x8x256xf32>
    %1 = vector.shape_cast %0 : vector<1x8x256xf32> to vector<8x256xf32>
    %c0_2 = arith.constant 0 : index
    %c0_3 = arith.constant 0 : index
    %2 = vector.load %arg3[%c0_2, %c0_3] : memref<8x2xf32, #tpu.memory_space<vmem>>, vector<8x1xf32>
    %3 = vector.broadcast %2 : vector<8x1xf32> to vector<8x256xf32>
    %4 = arith.mulf %1, %3 : vector<8x256xf32>
    %c0_4 = arith.constant 0 : index
    %c1 = arith.constant 1 : index
    %5 = vector.load %arg3[%c0_4, %c1] : memref<8x2xf32, #tpu.memory_space<vmem>>, vector<8x1xf32>
    %6 = vector.broadcast %5 : vector<8x1xf32> to vector<8x256xf32>
    %7 = arith.addf %4, %6 : vector<8x256xf32>
    %cst = arith.constant 0.000000e+00 : f32
    %8 = vector.broadcast %cst : f32 to vector<8x256xf32>
    %9 = arith.maximumf %7, %8 : vector<8x256xf32>
    %c0_5 = arith.constant 0 : index
    %c0_6 = arith.constant 0 : index
    %10 = vector.load %arg4[%c0_5, %c0_6] : memref<32x8xbf16, #tpu.memory_space<vmem>>, vector<32x8xbf16>
    %11 = arith.truncf %9 : vector<8x256xf32> to vector<8x256xbf16>
    %cst_7 = arith.constant dense<0.000000e+00> : vector<32x256xf32>
    %12 = tpu.matmul %10, %11, %cst_7 {dimension_numbers = #tpu.dot_dimension_numbers<[1], [0], [0], [1], [0, 0, 1, 1], [], []>} : vector<32x8xbf16>, vector<8x256xbf16>, vector<32x256xf32> -> vector<32x256xf32>
    %c0_8 = arith.constant 0 : index
    %c0_9 = arith.constant 0 : index
    %c0_10 = arith.constant 0 : index
    %13 = vector.load %arg5[%c0_8, %c0_9, %c0_10] : memref<1x32x256xf32, #tpu.memory_space<vmem>>, vector<1x32x256xf32>
    %14 = vector.shape_cast %13 : vector<1x32x256xf32> to vector<32x256xf32>
    %15 = arith.addf %12, %14 : vector<32x256xf32>
    %c0_11 = arith.constant 0 : index
    %c0_12 = arith.constant 0 : index
    %c0_13 = arith.constant 0 : index
    %16 = vector.load %arg6[%c0_11, %c0_12, %c0_13] : memref<1x32x256xf32, #tpu.memory_space<vmem>>, vector<1x32x256xf32>
    %17 = vector.shape_cast %16 : vector<1x32x256xf32> to vector<32x256xf32>
    %18 = vector.shape_cast %15 : vector<32x256xf32> to vector<1x32x256xf32>
    tpu.vector_store %arg6[%c0_11, %c0_12, %c0_13], %18 {strides = array<i32>} : memref<1x32x256xf32, #tpu.memory_space<vmem>>, vector<1x32x256xf32>,
    return
  }
  func.func @transform_0(%arg0: i32, %arg1: i32) -> (i32, i32, i32) {
    %c0_i32 = arith.constant 0 : i32
    %c0_i32_0 = arith.constant 0 : i32
    return %arg0, %c0_i32, %arg1 : i32, i32, i32
  }
  func.func @transform_1(%arg0: i32, %arg1: i32) -> (i32, i32) {
    %c0_i32 = arith.constant 0 : i32
    %c0_i32_0 = arith.constant 0 : i32
    %c0_i32_1 = arith.constant 0 : i32
    return %c0_i32, %c0_i32_0 : i32, i32
  }
  func.func @transform_2(%arg0: i32, %arg1: i32) -> (i32, i32) {
    %c0_i32 = arith.constant 0 : i32
    %c0_i32_0 = arith.constant 0 : i32
    %c0_i32_1 = arith.constant 0 : i32
    return %c0_i32, %c0_i32_0 : i32, i32
  }
  func.func @transform_3(%arg0: i32, %arg1: i32) -> (i32, i32, i32) {
    %c0_i32 = arith.constant 0 : i32
    %c0_i32_0 = arith.constant 0 : i32
    return %arg0, %c0_i32, %arg1 : i32, i32, i32
  }
  func.func @transform_4(%arg0: i32, %arg1: i32) -> (i32, i32, i32) {
    %c0_i32 = arith.constant 0 : i32
    %c0_i32_0 = arith.constant 0 : i32
    return %arg0, %c0_i32, %arg1 : i32, i32, i32
  }
}

</mosaic_0001>

<llo_original>
// kernel: self_attention_residual_block.4
$region0: #{self_attention_residual_block.4}
  #allocation0 [shape = 'u32[]', space=smem, size = 0x4, offset = 0x4, fixed_abs, tag = 'smem constant byte address 0x4 - core index']
  #allocation1 [shape = 'u32[144,128]{1,0:T(1,128)}', space=vmem, size = 0x12000, scoped, tag = 'internal scratch']
  %s0 = inlined_call_operand.vmem [shape: f32[2,8,256], index: 0, kind: input, shape index: {}]
  %s1 = inlined_call_operand.vmem [shape: f32[2,1,8,2], index: 1, kind: output, shape index: {}]
  %s2 = sld [smem:[#allocation0]]
  $region37: #{self_attention_residual_block.4} parent=0
    _
  %s4 = ssub.s32 1, %s2
  %s5 = scalar_select 0, %s4, %s2
  loop: start=0, step=1, limit=4
  $region2: #{self_attention_residual_block.4} parent=0 // loop_pre_header
    _
  $region3: #{self_attention_residual_block.4} parent=0 // loop_header
    %s7 = sphi 0, %s11
    %p8 = scmp.ge.s32.totalorder %s7, 4
    %s14 = sphi 0, %s26
    %s15 = sphi 0, %s22
    %s16 = sphi 0, %s14
    %s17 = sphi 0, %s15
    %s18 = sphi 0, %s16
    %s19 = sphi 0, %s17
    %s31 = sphi 0, %s33
    %s34 = sphi 0, %s31
    %s35 = sphi 0, %s34
    %s51 = sphi 0, %s35
    %s59 = sphi 0, %s61
    %s62 = sphi 0, %s59
    %s63 = sphi 0, %s62
    %s79 = sphi 0, %s63
  $region4: #{self_attention_residual_block.4} parent=0 // loop_header_branch
    %10 = sbr.rel (%p8) target = $region8
  $region5: #{self_attention_residual_block.4} parent=0 // loop_body
    %s12 = ssub.s32 %s7, 1
    %s13 = ssub.s32 %s7, 2
    %s20 = sadd.s32 1, %s15
    %p21 = scmp.ge.s32.totalorder %s20, 1
    %s22 = scalar_select %p21, 0, %s20
    %s23 = sadd.s32 1, %s14
    %s24 = scalar_select %p21, %s23, %s14
    %p25 = scmp.ge.s32.totalorder %s24, 2
    %s26 = scalar_select %p25, 0, %s24
    %s27 = ssub.s32 %s14, %s26
    %s28 = ssub.s32 %s15, %s22
    %s29 = sor.u32 %s27, %s28
    %p30 = scmp.eq.s32.totalorder %s29, 0
    %s32 = sadd.s32 %s31, 1
    %s33 = scalar_select %p30, %s31, %s32
    %p36 = pneg %p30
    %p37 = scmp.eq.s32.totalorder %s7, 1
    %p38 = por %p36, %p37
    %p39 = scmp.ne.s32.totalorder %s31, %s34
    %p40 = scmp.eq.s32.totalorder %s7, 0
    %p41 = por %p39, %p40
    %p42 = scmp.ne.s32.totalorder %s31, %s34
    %p43 = scmp.eq.s32.totalorder %s12, 1
    %p44 = por %p42, %p43
    %p45 = scmp.ne.s32.totalorder %s34, %s35
    %p46 = scmp.eq.s32.totalorder %s12, 0
    %p47 = por %p45, %p46
    %p48 = scmp.ne.s32.totalorder %s34, %s35
    %p49 = scmp.eq.s32.totalorder %s13, 1
    %p50 = por %p48, %p49
    %p52 = scmp.ne.s32.totalorder %s35, %s51
    %p53 = scmp.eq.s32.totalorder %s13, 0
    %p54 = por %p52, %p53
    %s55 = ssub.s32 %s14, %s26
    %s56 = ssub.s32 %s15, %s22
    %s57 = sor.u32 %s55, %s56
    %p58 = scmp.eq.s32.totalorder %s57, 0
    %s60 = sadd.s32 %s59, 1
    %s61 = scalar_select %p58, %s59, %s60
    %p64 = pneg %p58
    %p65 = scmp.eq.s32.totalorder %s7, 1
    %p66 = por %p64, %p65
    %p67 = scmp.ne.s32.totalorder %s59, %s62
    %p68 = scmp.eq.s32.totalorder %s7, 0
    %p69 = por %p67, %p68
    %p70 = scmp.ne.s32.totalorder %s59, %s62
    %p71 = scmp.eq.s32.totalorder %s12, 1
    %p72 = por %p70, %p71
    %p73 = scmp.ne.s32.totalorder %s62, %s63
    %p74 = scmp.eq.s32.totalorder %s12, 0
    %p75 = por %p73, %p74
    %p76 = scmp.ne.s32.totalorder %s62, %s63
    %p77 = scmp.eq.s32.totalorder %s13, 1
    %p78 = por %p76, %p77
    %p80 = scmp.ne.s32.totalorder %s63, %s79
    %p81 = scmp.eq.s32.totalorder %s13, 0
    %p82 = por %p80, %p81
    %p83 = scmp.le.s32.totalorder 1, %s7
    %p84 = scmp.lt.s32.totalorder %s7, 3
    %p85 = pnand %p83, %p84
    %p86 = pneg %p85
    // Predicated region
    $region9: #{self_attention_residual_block.4} parent=5 // pred_check
      _
    $region10: #{self_attention_residual_block.4} parent=5 // pred_check_branch
      %88 = sbr.rel (%p85) target = $region12
    $region11: #{self_attention_residual_block.4} parent=5 // pred_region
      %s89 = ssub.s32 %s7, 1
    $region12: #{self_attention_residual_block.4} parent=5 // pred_fallthru
      _
    %p90 = scmp.lt.s32.totalorder %s7, 2
    // Predicated region
    $region13: #{self_attention_residual_block.4} parent=5 // pred_check
      %p91 = pneg %p90
    $region14: #{self_attention_residual_block.4} parent=5 // pred_check_branch
      %93 = sbr.rel (%p91) target = $region16
    $region15: #{self_attention_residual_block.4} parent=5 // pred_region
      // Predicated region
      $region17: #{self_attention_residual_block.4} parent=15 // pred_check
        %p94 = pneg %p41
      $region18: #{self_attention_residual_block.4} parent=15 // pred_check_branch
        %96 = sbr.rel (%p94) target = $region20
      $region19: #{self_attention_residual_block.4} parent=15 // pred_region
        %s97 = smul.u32 2, %s15
        %p98 = scmp.lt.s32.totalorder %s14, 1
        %s99 = scalar_select %p98, %s14, 1
        %p100 = scmp.lt.s32.totalorder %s97, 1
        %s101 = scalar_select %p100, %s97, 1
        %s102 = smul.addr %s99, 2
        %s103 = sadd.s32 %s101, %s102
        %s104 = smul.addr %s103, 8
        %s105 = scalar_lea.vmem %s0, %s104
        %s106 = smul.u32 2, %s15
      $region20: #{self_attention_residual_block.4} parent=15 // pred_fallthru
        _
    $region16: #{self_attention_residual_block.4} parent=5 // pred_fallthru
      _
    %p107 = scmp.le.s32.totalorder 1, %s7
    %p108 = scmp.lt.s32.totalorder %s7, 3
    %p109 = pnand %p107, %p108
    %p110 = pneg %p109
    // Predicated region
    $region21: #{self_attention_residual_block.4} parent=5 // pred_check
      _
    $region22: #{self_attention_residual_block.4} parent=5 // pred_check_branch
      %112 = sbr.rel (%p109) target = $region24
    $region23: #{self_attention_residual_block.4} parent=5 // pred_region
      %s113 = ssub.s32 %s7, 1
      %s114 = smul.u32 2, %s17
      %p115 = scmp.lt.s32.totalorder %s16, 1
      %s116 = scalar_select %p115, %s16, 1
      %p117 = scmp.lt.s32.totalorder %s114, 1
      %s118 = scalar_select %p117, %s114, 1
      %s119 = smul.addr %s116, 2
      %s120 = sadd.s32 %s118, %s119
      %s121 = smul.addr %s120, 8
      %s122 = scalar_lea.vmem %s0, %s121
      %p123 = pneg %p47
      %p124 = pneg %p44
      %p125 = pneg %p75
      %p126 = pneg %p72
      %p127 = scmp.lt.s32.totalorder %s16, 1
      %s128 = scalar_select %p127, %s16, 1
      %p129 = scmp.lt.s32.totalorder %s17, 0
      %s130 = scalar_select %p129, %s17, 0
      %s131 = sadd.s32 %s130, %s128
      %s132 = smul.addr %s131, 8
      %s133 = scalar_lea.vmem %s1, %s132
      %s134 = smul.u32 2, %s17
      %p135 = scmp.lt.s32.totalorder %s16, 1
      %s136 = scalar_select %p135, %s16, 1
      %p137 = scmp.lt.s32.totalorder %s134, 1
      %s138 = scalar_select %p137, %s134, 1
      %s139 = smul.addr %s136, 2
      %s140 = sadd.s32 %s138, %s139
      %s141 = smul.addr %s140, 8
      %s142 = scalar_lea.vmem %s0, %s141
      %s143 = smul.u32 2, %s17
      %p144 = scmp.lt.s32.totalorder %s16, 1
      %s145 = scalar_select %p144, %s16, 1
      %p146 = scmp.lt.s32.totalorder %s17, 0
      %s147 = scalar_select %p146, %s17, 0
      %s148 = sadd.s32 %s147, %s145
      %s149 = smul.addr %s148, 8
      %s150 = scalar_lea.vmem %s1, %s149
      %v151 = vld [vmem:[%s142] sm:$0xff]
      %v152 = vld [vmem:[%s142 + $0x8] sm:$0xff]
      %v153 = vadd.f32 %v151, %v152
      %154 = vadd.xlane.f32.xlu0 %v153
      %v155 = vpop.xlane.xlu0 %154
      %v156 = vmul.f32 %v151, %v151
      %v157 = vmul.f32 %v152, %v152
      %v158 = vadd.f32 %v156, %v157
      %159 = vadd.xlane.f32.xlu0 %v158
      %v160 = vpop.xlane.xlu0 %159
      %vm161 = vcmask 7168
      %v162 = vsel %vm161, %v155, %v160
      %vm163 = vcmask 15360
      %164 = vst.msk [vmem:[%s150] sm:$0xff] %vm163, %v162
      %p165 = scmp.lt.s32.totalorder %s16, 1
      %s166 = scalar_select %p165, %s16, 1
      %p167 = scmp.lt.s32.totalorder %s17, 0
      %s168 = scalar_select %p167, %s17, 0
      %s169 = sadd.s32 %s168, %s166
      %s170 = smul.addr %s169, 8
      %s171 = scalar_lea.vmem %s1, %s170
      // Predicated region
      $region25: #{self_attention_residual_block.4} parent=23 // pred_check
        %p172 = pneg %p72
      $region26: #{self_attention_residual_block.4} parent=23 // pred_check_branch
        %174 = sbr.rel (%p172) target = $region28
      $region27: #{self_attention_residual_block.4} parent=23 // pred_region
        _
      $region28: #{self_attention_residual_block.4} parent=23 // pred_fallthru
        _
    $region24: #{self_attention_residual_block.4} parent=5 // pred_fallthru
      _
    %p175 = scmp.le.s32.totalorder 2, %s7
    // Predicated region
    $region29: #{self_attention_residual_block.4} parent=5 // pred_check
      %p176 = pneg %p175
    $region30: #{self_attention_residual_block.4} parent=5 // pred_check_branch
      %178 = sbr.rel (%p176) target = $region32
    $region31: #{self_attention_residual_block.4} parent=5 // pred_region
      %s179 = ssub.s32 %s7, 2
      // Predicated region
      $region33: #{self_attention_residual_block.4} parent=31 // pred_check
        %p180 = pneg %p78
      $region34: #{self_attention_residual_block.4} parent=31 // pred_check_branch
        %182 = sbr.rel (%p180) target = $region36
      $region35: #{self_attention_residual_block.4} parent=31 // pred_region
        %p183 = scmp.lt.s32.totalorder %s18, 1
        %s184 = scalar_select %p183, %s18, 1
        %p185 = scmp.lt.s32.totalorder %s19, 0
        %s186 = scalar_select %p185, %s19, 0
        %s187 = sadd.s32 %s186, %s184
        %s188 = smul.addr %s187, 8
        %s189 = scalar_lea.vmem %s1, %s188
      $region36: #{self_attention_residual_block.4} parent=31 // pred_fallthru
        _
    $region32: #{self_attention_residual_block.4} parent=5 // pred_fallthru
      _
  $region6: #{self_attention_residual_block.4} parent=0 // loop_footer
    %s11 = sadd.s32 1, %s7
  $region7: #{self_attention_residual_block.4} parent=0 // loop_footer_branch
    %6 = sbr.rel target = $region3
  $region8: #{self_attention_residual_block.4} parent=0 // loop_exit
    _

// kernel: self_attention_residual_block.7
$region0: #{self_attention_residual_block.7}
  #allocation0 [shape = 'u32[]', space=smem, size = 0x4, offset = 0x4, fixed_abs, tag = 'smem constant byte address 0x4 - core index']
  #allocation1 [shape = 'u32[144,128]{1,0:T(1,128)}', space=vmem, size = 0x12000, scoped, tag = 'internal scratch']
  %s0 = inlined_call_operand.vmem [shape: f32[2,8,256], index: 0, kind: input, shape index: {}]
  %s1 = inlined_call_operand.vmem [shape: f32[8,2], index: 1, kind: input, shape index: {}]
  %s2 = inlined_call_operand.vmem [shape: bf16[32,8], index: 2, kind: input, shape index: {}]
  %s3 = inlined_call_operand.vmem [shape: f32[2,32,256], index: 3, kind: input, shape index: {}]
  %s4 = inlined_call_operand.vmem [shape: f32[2,32,256], index: 4, kind: output, shape index: {}]
  %s5 = sld [smem:[#allocation0]]
  $region49: #{self_attention_residual_block.7} parent=0
    _
  %s7 = ssub.s32 1, %s5
  %s8 = scalar_select 0, %s7, %s5
  loop: start=0, step=1, limit=4
  $region2: #{self_attention_residual_block.7} parent=0 // loop_pre_header
    _
  $region3: #{self_attention_residual_block.7} parent=0 // loop_header
    %s10 = sphi 0, %s14
    %p11 = scmp.ge.s32.totalorder %s10, 4
    %s17 = sphi 0, %s29
    %s18 = sphi 0, %s25
    %s19 = sphi 0, %s17
    %s20 = sphi 0, %s18
    %s21 = sphi 0, %s19
    %s22 = sphi 0, %s20
    %s34 = sphi 0, %s36
    %s37 = sphi 0, %s34
    %s38 = sphi 0, %s37
    %s54 = sphi 0, %s38
    %s58 = sphi 0, %s58
    %s60 = sphi 0, %s58
    %s61 = sphi 0, %s60
    %s75 = sphi 0, %s61
    %s79 = sphi 0, %s79
    %s81 = sphi 0, %s79
    %s82 = sphi 0, %s81
    %s96 = sphi 0, %s82
    %s104 = sphi 0, %s106
    %s107 = sphi 0, %s104
    %s108 = sphi 0, %s107
    %s124 = sphi 0, %s108
    %s132 = sphi 0, %s134
    %s135 = sphi 0, %s132
    %s136 = sphi 0, %s135
    %s152 = sphi 0, %s136
  $region4: #{self_attention_residual_block.7} parent=0 // loop_header_branch
    %13 = sbr.rel (%p11) target = $region8
  $region5: #{self_attention_residual_block.7} parent=0 // loop_body
    %s15 = ssub.s32 %s10, 1
    %s16 = ssub.s32 %s10, 2
    %s23 = sadd.s32 1, %s18
    %p24 = scmp.ge.s32.totalorder %s23, 1
    %s25 = scalar_select %p24, 0, %s23
    %s26 = sadd.s32 1, %s17
    %s27 = scalar_select %p24, %s26, %s17
    %p28 = scmp.ge.s32.totalorder %s27, 2
    %s29 = scalar_select %p28, 0, %s27
    %s30 = ssub.s32 %s17, %s29
    %s31 = ssub.s32 %s18, %s25
    %s32 = sor.u32 %s30, %s31
    %p33 = scmp.eq.s32.totalorder %s32, 0
    %s35 = sadd.s32 %s34, 1
    %s36 = scalar_select %p33, %s34, %s35
    %p39 = pneg %p33
    %p40 = scmp.eq.s32.totalorder %s10, 1
    %p41 = por %p39, %p40
    %p42 = scmp.ne.s32.totalorder %s34, %s37
    %p43 = scmp.eq.s32.totalorder %s10, 0
    %p44 = por %p42, %p43
    %p45 = scmp.ne.s32.totalorder %s34, %s37
    %p46 = scmp.eq.s32.totalorder %s15, 1
    %p47 = por %p45, %p46
    %p48 = scmp.ne.s32.totalorder %s37, %s38
    %p49 = scmp.eq.s32.totalorder %s15, 0
    %p50 = por %p48, %p49
    %p51 = scmp.ne.s32.totalorder %s37, %s38
    %p52 = scmp.eq.s32.totalorder %s16, 1
    %p53 = por %p51, %p52
    %p55 = scmp.ne.s32.totalorder %s38, %s54
    %p56 = scmp.eq.s32.totalorder %s16, 0
    %p57 = por %p55, %p56
    %s59 = sadd.s32 %s58, 1
    %p62 = scmp.eq.s32.totalorder %s10, 1
    %p63 = scmp.ne.s32.totalorder %s58, %s60
    %p64 = scmp.eq.s32.totalorder %s10, 0
    %p65 = por %p63, %p64
    %p66 = scmp.ne.s32.totalorder %s58, %s60
    %p67 = scmp.eq.s32.totalorder %s15, 1
    %p68 = por %p66, %p67
    %p69 = scmp.ne.s32.totalorder %s60, %s61
    %p70 = scmp.eq.s32.totalorder %s15, 0
    %p71 = por %p69, %p70
    %p72 = scmp.ne.s32.totalorder %s60, %s61
    %p73 = scmp.eq.s32.totalorder %s16, 1
    %p74 = por %p72, %p73
    %p76 = scmp.ne.s32.totalorder %s61, %s75
    %p77 = scmp.eq.s32.totalorder %s16, 0
    %p78 = por %p76, %p77
    %s80 = sadd.s32 %s79, 1
    %p83 = scmp.eq.s32.totalorder %s10, 1
    %p84 = scmp.ne.s32.totalorder %s79, %s81
    %p85 = scmp.eq.s32.totalorder %s10, 0
    %p86 = por %p84, %p85
    %p87 = scmp.ne.s32.totalorder %s79, %s81
    %p88 = scmp.eq.s32.totalorder %s15, 1
    %p89 = por %p87, %p88
    %p90 = scmp.ne.s32.totalorder %s81, %s82
    %p91 = scmp.eq.s32.totalorder %s15, 0
    %p92 = por %p90, %p91
    %p93 = scmp.ne.s32.totalorder %s81, %s82
    %p94 = scmp.eq.s32.totalorder %s16, 1
    %p95 = por %p93, %p94
    %p97 = scmp.ne.s32.totalorder %s82, %s96
    %p98 = scmp.eq.s32.totalorder %s16, 0
    %p99 = por %p97, %p98
    %s100 = ssub.s32 %s17, %s29
    %s101 = ssub.s32 %s18, %s25
    %s102 = sor.u32 %s100, %s101
    %p103 = scmp.eq.s32.totalorder %s102, 0
    %s105 = sadd.s32 %s104, 1
    %s106 = scalar_select %p103, %s104, %s105
    %p109 = pneg %p103
    %p110 = scmp.eq.s32.totalorder %s10, 1
    %p111 = por %p109, %p110
    %p112 = scmp.ne.s32.totalorder %s104, %s107
    %p113 = scmp.eq.s32.totalorder %s10, 0
    %p114 = por %p112, %p113
    %p115 = scmp.ne.s32.totalorder %s104, %s107
    %p116 = scmp.eq.s32.totalorder %s15, 1
    %p117 = por %p115, %p116
    %p118 = scmp.ne.s32.totalorder %s107, %s108
    %p119 = scmp.eq.s32.totalorder %s15, 0
    %p120 = por %p118, %p119
    %p121 = scmp.ne.s32.totalorder %s107, %s108
    %p122 = scmp.eq.s32.totalorder %s16, 1
    %p123 = por %p121, %p122
    %p125 = scmp.ne.s32.totalorder %s108, %s124
    %p126 = scmp.eq.s32.totalorder %s16, 0
    %p127 = por %p125, %p126
    %s128 = ssub.s32 %s17, %s29
    %s129 = ssub.s32 %s18, %s25
    %s130 = sor.u32 %s128, %s129
    %p131 = scmp.eq.s32.totalorder %s130, 0
    %s133 = sadd.s32 %s132, 1
    %s134 = scalar_select %p131, %s132, %s133
    %p137 = pneg %p131
    %p138 = scmp.eq.s32.totalorder %s10, 1
    %p139 = por %p137, %p138
    %p140 = scmp.ne.s32.totalorder %s132, %s135
    %p141 = scmp.eq.s32.totalorder %s10, 0
    %p142 = por %p140, %p141
    %p143 = scmp.ne.s32.totalorder %s132, %s135
    %p144 = scmp.eq.s32.totalorder %s15, 1
    %p145 = por %p143, %p144
    %p146 = scmp.ne.s32.totalorder %s135, %s136
    %p147 = scmp.eq.s32.totalorder %s15, 0
    %p148 = por %p146, %p147
    %p149 = scmp.ne.s32.totalorder %s135, %s136
    %p150 = scmp.eq.s32.totalorder %s16, 1
    %p151 = por %p149, %p150
    %p153 = scmp.ne.s32.totalorder %s136, %s152
    %p154 = scmp.eq.s32.totalorder %s16, 0
    %p155 = por %p153, %p154
    %p156 = scmp.le.s32.totalorder 1, %s10
    %p157 = scmp.lt.s32.totalorder %s10, 3
    %p158 = pnand %p156, %p157
    %p159 = pneg %p158
    // Predicated region
    $region9: #{self_attention_residual_block.7} parent=5 // pred_check
      _
    $region10: #{self_attention_residual_block.7} parent=5 // pred_check_branch
      %161 = sbr.rel (%p158) target = $region12
    $region11: #{self_attention_residual_block.7} parent=5 // pred_region
      %s162 = ssub.s32 %s10, 1
      // Predicated region
      $region13: #{self_attention_residual_block.7} parent=11 // pred_check
        %p163 = pneg %p71
      $region14: #{self_attention_residual_block.7} parent=11 // pred_check_branch
        %165 = sbr.rel (%p163) target = $region16
      $region15: #{self_attention_residual_block.7} parent=11 // pred_region
        _
      $region16: #{self_attention_residual_block.7} parent=11 // pred_fallthru
        _
      // Predicated region
      $region17: #{self_attention_residual_block.7} parent=11 // pred_check
        %p166 = pneg %p92
      $region18: #{self_attention_residual_block.7} parent=11 // pred_check_branch
        %168 = sbr.rel (%p166) target = $region20
      $region19: #{self_attention_residual_block.7} parent=11 // pred_region
        _
      $region20: #{self_attention_residual_block.7} parent=11 // pred_fallthru
        _
    $region12: #{self_attention_residual_block.7} parent=5 // pred_fallthru
      _
    %p169 = scmp.lt.s32.totalorder %s10, 2
    // Predicated region
    $region21: #{self_attention_residual_block.7} parent=5 // pred_check
      %p170 = pneg %p169
    $region22: #{self_attention_residual_block.7} parent=5 // pred_check_branch
      %172 = sbr.rel (%p170) target = $region24
    $region23: #{self_attention_residual_block.7} parent=5 // pred_region
      // Predicated region
      $region25: #{self_attention_residual_block.7} parent=23 // pred_check
        %p173 = pneg %p44
      $region26: #{self_attention_residual_block.7} parent=23 // pred_check_branch
        %175 = sbr.rel (%p173) target = $region28
      $region27: #{self_attention_residual_block.7} parent=23 // pred_region
        %s176 = smul.u32 2, %s18
        %p177 = scmp.lt.s32.totalorder %s17, 1
        %s178 = scalar_select %p177, %s17, 1
        %p179 = scmp.lt.s32.totalorder %s176, 1
        %s180 = scalar_select %p179, %s176, 1
        %s181 = smul.addr %s178, 2
        %s182 = sadd.s32 %s180, %s181
        %s183 = smul.addr %s182, 8
        %s184 = scalar_lea.vmem %s0, %s183
        %s185 = smul.u32 2, %s18
      $region28: #{self_attention_residual_block.7} parent=23 // pred_fallthru
        _
      // Predicated region
      $region29: #{self_attention_residual_block.7} parent=23 // pred_check
        %p186 = pneg %p114
      $region30: #{self_attention_residual_block.7} parent=23 // pred_check_branch
        %188 = sbr.rel (%p186) target = $region32
      $region31: #{self_attention_residual_block.7} parent=23 // pred_region
        %s189 = smul.u32 2, %s18
        %p190 = scmp.lt.s32.totalorder %s17, 1
        %s191 = scalar_select %p190, %s17, 1
        %p192 = scmp.lt.s32.totalorder %s189, 1
        %s193 = scalar_select %p192, %s189, 1
        %s194 = smul.addr %s191, 8
        %s195 = sadd.s32 %s193, %s194
        %s196 = smul.addr %s195, 8
        %s197 = scalar_lea.vmem %s3, %s196
        %s198 = smul.u32 2, %s18
      $region32: #{self_attention_residual_block.7} parent=23 // pred_fallthru
        _
    $region24: #{self_attention_residual_block.7} parent=5 // pred_fallthru
      _
    %p199 = scmp.le.s32.totalorder 1, %s10
    %p200 = scmp.lt.s32.totalorder %s10, 3
    %p201 = pnand %p199, %p200
    %p202 = pneg %p201
    // Predicated region
    $region33: #{self_attention_residual_block.7} parent=5 // pred_check
      _
    $region34: #{self_attention_residual_block.7} parent=5 // pred_check_branch
      %204 = sbr.rel (%p201) target = $region36
    $region35: #{self_attention_residual_block.7} parent=5 // pred_region
      %s205 = ssub.s32 %s10, 1
      %s206 = smul.u32 2, %s20
      %p207 = scmp.lt.s32.totalorder %s19, 1
      %s208 = scalar_select %p207, %s19, 1
      %p209 = scmp.lt.s32.totalorder %s206, 1
      %s210 = scalar_select %p209, %s206, 1
      %s211 = smul.addr %s208, 2
      %s212 = sadd.s32 %s210, %s211
      %s213 = smul.addr %s212, 8
      %s214 = scalar_lea.vmem %s0, %s213
      %p215 = pneg %p50
      %p216 = pneg %p47
      %p217 = pneg %p71
      %p218 = pneg %p68
      %p219 = pneg %p92
      %p220 = pneg %p89
      %s221 = smul.u32 2, %s20
      %p222 = scmp.lt.s32.totalorder %s19, 1
      %s223 = scalar_select %p222, %s19, 1
      %p224 = scmp.lt.s32.totalorder %s221, 1
      %s225 = scalar_select %p224, %s221, 1
      %s226 = smul.addr %s223, 8
      %s227 = sadd.s32 %s225, %s226
      %s228 = smul.addr %s227, 8
      %s229 = scalar_lea.vmem %s3, %s228
      %p230 = pneg %p120
      %p231 = pneg %p117
      %p232 = pneg %p148
      %p233 = pneg %p145
      %s234 = smul.u32 2, %s20
      %p235 = scmp.lt.s32.totalorder %s19, 1
      %s236 = scalar_select %p235, %s19, 1
      %p237 = scmp.lt.s32.totalorder %s234, 1
      %s238 = scalar_select %p237, %s234, 1
      %s239 = smul.addr %s236, 8
      %s240 = sadd.s32 %s238, %s239
      %s241 = smul.addr %s240, 8
      %s242 = scalar_lea.vmem %s4, %s241
      %s243 = smul.u32 2, %s20
      %p244 = scmp.lt.s32.totalorder %s19, 1
      %s245 = scalar_select %p244, %s19, 1
      %p246 = scmp.lt.s32.totalorder %s243, 1
      %s247 = scalar_select %p246, %s243, 1
      %s248 = smul.addr %s245, 2
      %s249 = sadd.s32 %s247, %s248
      %s250 = smul.addr %s249, 8
      %s251 = scalar_lea.vmem %s0, %s250
      %s252 = smul.u32 2, %s20
      %s253 = smul.u32 2, %s20
      %p254 = scmp.lt.s32.totalorder %s19, 1
      %s255 = scalar_select %p254, %s19, 1
      %p256 = scmp.lt.s32.totalorder %s253, 1
      %s257 = scalar_select %p256, %s253, 1
      %s258 = smul.addr %s255, 8
      %s259 = sadd.s32 %s257, %s258
      %s260 = smul.addr %s259, 8
      %s261 = scalar_lea.vmem %s3, %s260
      %s262 = smul.u32 2, %s20
      %s263 = smul.u32 2, %s20
      %p264 = scmp.lt.s32.totalorder %s19, 1
      %s265 = scalar_select %p264, %s19, 1
      %p266 = scmp.lt.s32.totalorder %s263, 1
      %s267 = scalar_select %p266, %s263, 1
      %s268 = smul.addr %s265, 8
      %s269 = sadd.s32 %s267, %s268
      %s270 = smul.addr %s269, 8
      %s271 = scalar_lea.vmem %s4, %s270
      %s272 = smul.u32 2, %s20
      %v274 = vld [vmem:[%s251] sm:$0xff]
      %v275 = vld [vmem:[%s251 + $0x8] sm:$0xff]
      %v276 = vld [vmem:[%s1] sm:$0xff]
      %278 = vset.pattern.permute.xlu0 0
      %279 = vperm.xlu0 %278, %v276
      %v280 = vpop.permute.xlu0 %279
      %v282 = vmul.f32 %v274, %v280
      %v283 = vmul.f32 %v275, %v280
      %284 = vset.pattern.permute.xlu0 1
      %285 = vperm.xlu0 %284, %v276
      %v286 = vpop.permute.xlu0 %285
      %v288 = vadd.f32 %v282, %v286
      %v289 = vadd.f32 %v283, %v286
      %v290 = vmax.f32 %v288, 0.0
      %v291 = vmax.f32 %v289, 0.0
      %v292 = vld [vmem:[%s2] sm:$0xf]
      %v293 = vld [vmem:[%s2 + $0x4] sm:$0xf]
      %v294 = vld [vmem:[%s2 + $0x8] sm:$0xf]
      %v295 = vld [vmem:[%s2 + $0xc] sm:$0xf]
      %v296 = vpack.c.bf16 %v290, %v290
      %v297 = vpack.c.bf16 %v291, %v291
      %v298 = vld [vmem:[%s261] sm:$0xff]
      %v299 = vld [vmem:[%s261 + $0x8] sm:$0xff]
      %v300 = vld [vmem:[%s261 + $0x10] sm:$0xff]
      %v301 = vld [vmem:[%s261 + $0x18] sm:$0xff]
      %v302 = vld [vmem:[%s261 + $0x20] sm:$0xff]
      %v303 = vld [vmem:[%s261 + $0x28] sm:$0xff]
      %v304 = vld [vmem:[%s261 + $0x30] sm:$0xff]
      %v305 = vld [vmem:[%s261 + $0x38] sm:$0xff]
      %v310 = vunpack.c.l.b16 %v292
      %v311 = vunpack.c.l.b16 %v293
      %v312 = vunpack.c.l.b16 %v294
      %v313 = vunpack.c.l.b16 %v295
      %v314 = vpack.c.b16 %v311, %v310
      %v315 = vpack.c.b16 %v313, %v312
      %vm316 = vcmask 64512
      %v318 = vsel %vm316, %v314, 0
      %v321 = vsel %vm316, %v315, 0
      %vm323 = vcmask 1043456
      %v325 = vsel %vm323, %v296, 0
      %v328 = vsel %vm323, %v297, 0
      %330 = vmatprep.subr.bf16.mxu0 %v328
      %331 = vmatpush1.bf16.msra.mxu0 %v325
      %332 = vmatprep.subr.bf16.mxu0 0
      %333 = vmatpush1.bf16.msra.mxu0 0
      %334 = vmatprep.subr.bf16.mxu0 0
      %335 = vmatpush1.bf16.msra.mxu0 0
      %336 = vmatprep.subr.bf16.mxu0 0
      %337 = vmatpush1.bf16.msra.mxu0 0
      %338 = vmatprep.subr.bf16.mxu0 0
      %339 = vmatpush1.bf16.msra.mxu0 0
      %340 = vmatprep.subr.bf16.mxu0 0
      %341 = vmatpush1.bf16.msra.mxu0 0
      %342 = vmatprep.subr.bf16.mxu0 0
      %343 = vmatpush1.bf16.msra.mxu0 0
      %344 = vmatprep.subr.bf16.mxu0 0
      %345 = vmatpush1.bf16.msra.mxu0 0
      %346 = vmatprep.subr.bf16.mxu0 0
      %347 = vmatpush1.bf16.msra.mxu0 0
      %348 = vmatprep.subr.bf16.mxu0 0
      %349 = vmatpush1.bf16.msra.mxu0 0
      %350 = vmatprep.subr.bf16.mxu0 0
      %351 = vmatpush1.bf16.msra.mxu0 0
      %352 = vmatprep.subr.bf16.mxu0 0
      %353 = vmatpush1.bf16.msra.mxu0 0
      %354 = vmatprep.subr.bf16.mxu0 0
      %355 = vmatpush1.bf16.msra.mxu0 0
      %356 = vmatprep.subr.bf16.mxu0 0
      %357 = vmatpush1.bf16.msra.mxu0 0
      %358 = vmatprep.subr.bf16.mxu0 0
      %359 = vmatpush1.bf16.msra.mxu0 0
      %360 = vmatprep.subr.bf16.mxu0 0
      %361 = vmatpush1.bf16.msra.mxu0 0
      %362 = vmatprep.mubr.bf16.mxu0 0
      %363 = vmatmul.mubr.bf16.gmra.mrb[0].mxu0 %v318
      %v364 = vpop.f32.mrb[0].mxu0
      %v365 = vadd.f32 %v298, %v364
      %v366 = vpop.f32.mrb[0].mxu0
      %v367 = vadd.f32 %v299, %v366
      %v368 = vpop.f32.mrb[0].mxu0
      %v369 = vadd.f32 %v300, %v368
      %v370 = vpop.f32.mrb[0].mxu0
      %v371 = vadd.f32 %v301, %v370
      %372 = vmatprep.mubr.bf16.mxu0 0
      %373 = vmatmul.mubr.bf16.gmra.mrb[0].mxu0 %v321
      %v374 = vpop.f32.mrb[0].mxu0
      %v375 = vadd.f32 %v302, %v374
      %v376 = vpop.f32.mrb[0].mxu0
      %v377 = vadd.f32 %v303, %v376
      %v378 = vpop.f32.mrb[0].mxu0
      %v379 = vadd.f32 %v304, %v378
      %v380 = vpop.f32.mrb[0].mxu0
      %v381 = vadd.f32 %v305, %v380
      %382 = vdwg.mxu0
      %383 = vst [vmem:[%s271] sm:$0xff] %v365
      %384 = vst [vmem:[%s271 + $0x8] sm:$0xff] %v367
      %385 = vst [vmem:[%s271 + $0x10] sm:$0xff] %v369
      %386 = vst [vmem:[%s271 + $0x18] sm:$0xff] %v371
      %387 = vst [vmem:[%s271 + $0x20] sm:$0xff] %v375
      %388 = vst [vmem:[%s271 + $0x28] sm:$0xff] %v377
      %389 = vst [vmem:[%s271 + $0x30] sm:$0xff] %v379
      %390 = vst [vmem:[%s271 + $0x38] sm:$0xff] %v381
      %s391 = smul.u32 2, %s20
      %p392 = scmp.lt.s32.totalorder %s19, 1
      %s393 = scalar_select %p392, %s19, 1
      %p394 = scmp.lt.s32.totalorder %s391, 1
      %s395 = scalar_select %p394, %s391, 1
      %s396 = smul.addr %s393, 8
      %s397 = sadd.s32 %s395, %s396
      %s398 = smul.addr %s397, 8
      %s399 = scalar_lea.vmem %s4, %s398
      // Predicated region
      $region37: #{self_attention_residual_block.7} parent=35 // pred_check
        %p400 = pneg %p145
      $region38: #{self_attention_residual_block.7} parent=35 // pred_check_branch
        %402 = sbr.rel (%p400) target = $region40
      $region39: #{self_attention_residual_block.7} parent=35 // pred_region
        %s403 = smul.u32 2, %s20
      $region40: #{self_attention_residual_block.7} parent=35 // pred_fallthru
        _
    $region36: #{self_attention_residual_block.7} parent=5 // pred_fallthru
      _
    %p404 = scmp.le.s32.totalorder 2, %s10
    // Predicated region
    $region41: #{self_attention_residual_block.7} parent=5 // pred_check
      %p405 = pneg %p404
    $region42: #{self_attention_residual_block.7} parent=5 // pred_check_branch
      %407 = sbr.rel (%p405) target = $region44
    $region43: #{self_attention_residual_block.7} parent=5 // pred_region
      %s408 = ssub.s32 %s10, 2
      // Predicated region
      $region45: #{self_attention_residual_block.7} parent=43 // pred_check
        %p409 = pneg %p151
      $region46: #{self_attention_residual_block.7} parent=43 // pred_check_branch
        %411 = sbr.rel (%p409) target = $region48
      $region47: #{self_attention_residual_block.7} parent=43 // pred_region
        %s412 = smul.u32 2, %s22
        %p413 = scmp.lt.s32.totalorder %s21, 1
        %s414 = scalar_select %p413, %s21, 1
        %p415 = scmp.lt.s32.totalorder %s412, 1
        %s416 = scalar_select %p415, %s412, 1
        %s417 = smul.addr %s414, 8
        %s418 = sadd.s32 %s416, %s417
        %s419 = smul.addr %s418, 8
        %s420 = scalar_lea.vmem %s4, %s419
      $region48: #{self_attention_residual_block.7} parent=43 // pred_fallthru
        _
    $region44: #{self_attention_residual_block.7} parent=5 // pred_fallthru
      _
  $region6: #{self_attention_residual_block.7} parent=0 // loop_footer
    %s14 = sadd.s32 1, %s10
  $region7: #{self_attention_residual_block.7} parent=0 // loop_footer_branch
    %9 = sbr.rel target = $region3
  $region8: #{self_attention_residual_block.7} parent=0 // loop_exit
    _

// kernel: self_attention_residual_block.5
$region0: #{self_attention_residual_block.5}
  #allocation0 [shape = 'u32[]', space=smem, size = 0x4, offset = 0x4, fixed_abs, tag = 'smem constant byte address 0x4 - core index']
  #allocation1 [shape = 'u32[144,128]{1,0:T(1,128)}', space=vmem, size = 0x12000, scoped, tag = 'internal scratch']
  %s0 = inlined_call_operand.vmem [shape: f32[2,8,256], index: 0, kind: input, shape index: {}]
  %s1 = inlined_call_operand.vmem [shape: f32[8,2], index: 1, kind: input, shape index: {}]
  %s2 = inlined_call_operand.vmem [shape: bf16[32,8], index: 2, kind: input, shape index: {}]
  %s3 = inlined_call_operand.vmem [shape: bf16[8,8], index: 3, kind: input, shape index: {}]
  %s4 = inlined_call_operand.vmem [shape: f32[2,32,256], index: 4, kind: output, shape index: {0}]
  %s5 = inlined_call_operand.vmem [shape: f32[2,8,256], index: 5, kind: output, shape index: {1}]
  %s6 = inlined_call_operand.vmem [shape: f32[2,1,8,2], index: 6, kind: output, shape index: {2}]
  %7 = xla_tuple %s4, %s5, %s6
  %s8 = sld [smem:[#allocation0]]
  $region65: #{self_attention_residual_block.5} parent=0
    _
  %s10 = ssub.s32 1, %s8
  %s11 = scalar_select 0, %s10, %s8
  loop: start=0, step=1, limit=4
  $region2: #{self_attention_residual_block.5} parent=0 // loop_pre_header
    _
  $region3: #{self_attention_residual_block.5} parent=0 // loop_header
    %s13 = sphi 0, %s17
    %p14 = scmp.ge.s32.totalorder %s13, 4
    %s20 = sphi 0, %s32
    %s21 = sphi 0, %s28
    %s22 = sphi 0, %s20
    %s23 = sphi 0, %s21
    %s24 = sphi 0, %s22
    %s25 = sphi 0, %s23
    %s37 = sphi 0, %s39
    %s40 = sphi 0, %s37
    %s41 = sphi 0, %s40
    %s57 = sphi 0, %s41
    %s61 = sphi 0, %s61
    %s63 = sphi 0, %s61
    %s64 = sphi 0, %s63
    %s78 = sphi 0, %s64
    %s82 = sphi 0, %s82
    %s84 = sphi 0, %s82
    %s85 = sphi 0, %s84
    %s99 = sphi 0, %s85
    %s103 = sphi 0, %s103
    %s105 = sphi 0, %s103
    %s106 = sphi 0, %s105
    %s120 = sphi 0, %s106
    %s128 = sphi 0, %s130
    %s131 = sphi 0, %s128
    %s132 = sphi 0, %s131
    %s148 = sphi 0, %s132
    %s156 = sphi 0, %s158
    %s159 = sphi 0, %s156
    %s160 = sphi 0, %s159
    %s176 = sphi 0, %s160
    %s184 = sphi 0, %s186
    %s187 = sphi 0, %s184
    %s188 = sphi 0, %s187
    %s204 = sphi 0, %s188
  $region4: #{self_attention_residual_block.5} parent=0 // loop_header_branch
    %16 = sbr.rel (%p14) target = $region8
  $region5: #{self_attention_residual_block.5} parent=0 // loop_body
    %s18 = ssub.s32 %s13, 1
    %s19 = ssub.s32 %s13, 2
    %s26 = sadd.s32 1, %s21
    %p27 = scmp.ge.s32.totalorder %s26, 1
    %s28 = scalar_select %p27, 0, %s26
    %s29 = sadd.s32 1, %s20
    %s30 = scalar_select %p27, %s29, %s20
    %p31 = scmp.ge.s32.totalorder %s30, 2
    %s32 = scalar_select %p31, 0, %s30
    %s33 = ssub.s32 %s20, %s32
    %s34 = ssub.s32 %s21, %s28
    %s35 = sor.u32 %s33, %s34
    %p36 = scmp.eq.s32.totalorder %s35, 0
    %s38 = sadd.s32 %s37, 1
    %s39 = scalar_select %p36, %s37, %s38
    %p42 = pneg %p36
    %p43 = scmp.eq.s32.totalorder %s13, 1
    %p44 = por %p42, %p43
    %p45 = scmp.ne.s32.totalorder %s37, %s40
    %p46 = scmp.eq.s32.totalorder %s13, 0
    %p47 = por %p45, %p46
    %p48 = scmp.ne.s32.totalorder %s37, %s40
    %p49 = scmp.eq.s32.totalorder %s18, 1
    %p50 = por %p48, %p49
    %p51 = scmp.ne.s32.totalorder %s40, %s41
    %p52 = scmp.eq.s32.totalorder %s18, 0
    %p53 = por %p51, %p52
    %p54 = scmp.ne.s32.totalorder %s40, %s41
    %p55 = scmp.eq.s32.totalorder %s19, 1
    %p56 = por %p54, %p55
    %p58 = scmp.ne.s32.totalorder %s41, %s57
    %p59 = scmp.eq.s32.totalorder %s19, 0
    %p60 = por %p58, %p59
    %s62 = sadd.s32 %s61, 1
    %p65 = scmp.eq.s32.totalorder %s13, 1
    %p66 = scmp.ne.s32.totalorder %s61, %s63
    %p67 = scmp.eq.s32.totalorder %s13, 0
    %p68 = por %p66, %p67
    %p69 = scmp.ne.s32.totalorder %s61, %s63
    %p70 = scmp.eq.s32.totalorder %s18, 1
    %p71 = por %p69, %p70
    %p72 = scmp.ne.s32.totalorder %s63, %s64
    %p73 = scmp.eq.s32.totalorder %s18, 0
    %p74 = por %p72, %p73
    %p75 = scmp.ne.s32.totalorder %s63, %s64
    %p76 = scmp.eq.s32.totalorder %s19, 1
    %p77 = por %p75, %p76
    %p79 = scmp.ne.s32.totalorder %s64, %s78
    %p80 = scmp.eq.s32.totalorder %s19, 0
    %p81 = por %p79, %p80
    %s83 = sadd.s32 %s82, 1
    %p86 = scmp.eq.s32.totalorder %s13, 1
    %p87 = scmp.ne.s32.totalorder %s82, %s84
    %p88 = scmp.eq.s32.totalorder %s13, 0
    %p89 = por %p87, %p88
    %p90 = scmp.ne.s32.totalorder %s82, %s84
    %p91 = scmp.eq.s32.totalorder %s18, 1
    %p92 = por %p90, %p91
    %p93 = scmp.ne.s32.totalorder %s84, %s85
    %p94 = scmp.eq.s32.totalorder %s18, 0
    %p95 = por %p93, %p94
    %p96 = scmp.ne.s32.totalorder %s84, %s85
    %p97 = scmp.eq.s32.totalorder %s19, 1
    %p98 = por %p96, %p97
    %p100 = scmp.ne.s32.totalorder %s85, %s99
    %p101 = scmp.eq.s32.totalorder %s19, 0
    %p102 = por %p100, %p101
    %s104 = sadd.s32 %s103, 1
    %p107 = scmp.eq.s32.totalorder %s13, 1
    %p108 = scmp.ne.s32.totalorder %s103, %s105
    %p109 = scmp.eq.s32.totalorder %s13, 0
    %p110 = por %p108, %p109
    %p111 = scmp.ne.s32.totalorder %s103, %s105
    %p112 = scmp.eq.s32.totalorder %s18, 1
    %p113 = por %p111, %p112
    %p114 = scmp.ne.s32.totalorder %s105, %s106
    %p115 = scmp.eq.s32.totalorder %s18, 0
    %p116 = por %p114, %p115
    %p117 = scmp.ne.s32.totalorder %s105, %s106
    %p118 = scmp.eq.s32.totalorder %s19, 1
    %p119 = por %p117, %p118
    %p121 = scmp.ne.s32.totalorder %s106, %s120
    %p122 = scmp.eq.s32.totalorder %s19, 0
    %p123 = por %p121, %p122
    %s124 = ssub.s32 %s20, %s32
    %s125 = ssub.s32 %s21, %s28
    %s126 = sor.u32 %s124, %s125
    %p127 = scmp.eq.s32.totalorder %s126, 0
    %s129 = sadd.s32 %s128, 1
    %s130 = scalar_select %p127, %s128, %s129
    %p133 = pneg %p127
    %p134 = scmp.eq.s32.totalorder %s13, 1
    %p135 = por %p133, %p134
    %p136 = scmp.ne.s32.totalorder %s128, %s131
    %p137 = scmp.eq.s32.totalorder %s13, 0
    %p138 = por %p136, %p137
    %p139 = scmp.ne.s32.totalorder %s128, %s131
    %p140 = scmp.eq.s32.totalorder %s18, 1
    %p141 = por %p139, %p140
    %p142 = scmp.ne.s32.totalorder %s131, %s132
    %p143 = scmp.eq.s32.totalorder %s18, 0
    %p144 = por %p142, %p143
    %p145 = scmp.ne.s32.totalorder %s131, %s132
    %p146 = scmp.eq.s32.totalorder %s19, 1
    %p147 = por %p145, %p146
    %p149 = scmp.ne.s32.totalorder %s132, %s148
    %p150 = scmp.eq.s32.totalorder %s19, 0
    %p151 = por %p149, %p150
    %s152 = ssub.s32 %s20, %s32
    %s153 = ssub.s32 %s21, %s28
    %s154 = sor.u32 %s152, %s153
    %p155 = scmp.eq.s32.totalorder %s154, 0
    %s157 = sadd.s32 %s156, 1
    %s158 = scalar_select %p155, %s156, %s157
    %p161 = pneg %p155
    %p162 = scmp.eq.s32.totalorder %s13, 1
    %p163 = por %p161, %p162
    %p164 = scmp.ne.s32.totalorder %s156, %s159
    %p165 = scmp.eq.s32.totalorder %s13, 0
    %p166 = por %p164, %p165
    %p167 = scmp.ne.s32.totalorder %s156, %s159
    %p168 = scmp.eq.s32.totalorder %s18, 1
    %p169 = por %p167, %p168
    %p170 = scmp.ne.s32.totalorder %s159, %s160
    %p171 = scmp.eq.s32.totalorder %s18, 0
    %p172 = por %p170, %p171
    %p173 = scmp.ne.s32.totalorder %s159, %s160
    %p174 = scmp.eq.s32.totalorder %s19, 1
    %p175 = por %p173, %p174
    %p177 = scmp.ne.s32.totalorder %s160, %s176
    %p178 = scmp.eq.s32.totalorder %s19, 0
    %p179 = por %p177, %p178
    %s180 = ssub.s32 %s20, %s32
    %s181 = ssub.s32 %s21, %s28
    %s182 = sor.u32 %s180, %s181
    %p183 = scmp.eq.s32.totalorder %s182, 0
    %s185 = sadd.s32 %s184, 1
    %s186 = scalar_select %p183, %s184, %s185
    %p189 = pneg %p183
    %p190 = scmp.eq.s32.totalorder %s13, 1
    %p191 = por %p189, %p190
    %p192 = scmp.ne.s32.totalorder %s184, %s187
    %p193 = scmp.eq.s32.totalorder %s13, 0
    %p194 = por %p192, %p193
    %p195 = scmp.ne.s32.totalorder %s184, %s187
    %p196 = scmp.eq.s32.totalorder %s18, 1
    %p197 = por %p195, %p196
    %p198 = scmp.ne.s32.totalorder %s187, %s188
    %p199 = scmp.eq.s32.totalorder %s18, 0
    %p200 = por %p198, %p199
    %p201 = scmp.ne.s32.totalorder %s187, %s188
    %p202 = scmp.eq.s32.totalorder %s19, 1
    %p203 = por %p201, %p202
    %p205 = scmp.ne.s32.totalorder %s188, %s204
    %p206 = scmp.eq.s32.totalorder %s19, 0
    %p207 = por %p205, %p206
    %p208 = scmp.le.s32.totalorder 1, %s13
    %p209 = scmp.lt.s32.totalorder %s13, 3
    %p210 = pnand %p208, %p209
    %p211 = pneg %p210
    // Predicated region
    $region9: #{self_attention_residual_block.5} parent=5 // pred_check
      _
    $region10: #{self_attention_residual_block.5} parent=5 // pred_check_branch
      %213 = sbr.rel (%p210) target = $region12
    $region11: #{self_attention_residual_block.5} parent=5 // pred_region
      %s214 = ssub.s32 %s13, 1
      // Predicated region
      $region13: #{self_attention_residual_block.5} parent=11 // pred_check
        %p215 = pneg %p74
      $region14: #{self_attention_residual_block.5} parent=11 // pred_check_branch
        %217 = sbr.rel (%p215) target = $region16
      $region15: #{self_attention_residual_block.5} parent=11 // pred_region
        _
      $region16: #{self_attention_residual_block.5} parent=11 // pred_fallthru
        _
      // Predicated region
      $region17: #{self_attention_residual_block.5} parent=11 // pred_check
        %p218 = pneg %p95
      $region18: #{self_attention_residual_block.5} parent=11 // pred_check_branch
        %220 = sbr.rel (%p218) target = $region20
      $region19: #{self_attention_residual_block.5} parent=11 // pred_region
        _
      $region20: #{self_attention_residual_block.5} parent=11 // pred_fallthru
        _
      // Predicated region
      $region21: #{self_attention_residual_block.5} parent=11 // pred_check
        %p221 = pneg %p116
      $region22: #{self_attention_residual_block.5} parent=11 // pred_check_branch
        %223 = sbr.rel (%p221) target = $region24
      $region23: #{self_attention_residual_block.5} parent=11 // pred_region
        _
      $region24: #{self_attention_residual_block.5} parent=11 // pred_fallthru
        _
    $region12: #{self_attention_residual_block.5} parent=5 // pred_fallthru
      _
    %p224 = scmp.lt.s32.totalorder %s13, 2
    // Predicated region
    $region25: #{self_attention_residual_block.5} parent=5 // pred_check
      %p225 = pneg %p224
    $region26: #{self_attention_residual_block.5} parent=5 // pred_check_branch
      %227 = sbr.rel (%p225) target = $region28
    $region27: #{self_attention_residual_block.5} parent=5 // pred_region
      // Predicated region
      $region29: #{self_attention_residual_block.5} parent=27 // pred_check
        %p228 = pneg %p47
      $region30: #{self_attention_residual_block.5} parent=27 // pred_check_branch
        %230 = sbr.rel (%p228) target = $region32
      $region31: #{self_attention_residual_block.5} parent=27 // pred_region
        %s231 = smul.u32 2, %s21
        %p232 = scmp.lt.s32.totalorder %s20, 1
        %s233 = scalar_select %p232, %s20, 1
        %p234 = scmp.lt.s32.totalorder %s231, 1
        %s235 = scalar_select %p234, %s231, 1
        %s236 = smul.addr %s233, 2
        %s237 = sadd.s32 %s235, %s236
        %s238 = smul.addr %s237, 8
        %s239 = scalar_lea.vmem %s0, %s238
        %s240 = smul.u32 2, %s21
      $region32: #{self_attention_residual_block.5} parent=27 // pred_fallthru
        _
    $region28: #{self_attention_residual_block.5} parent=5 // pred_fallthru
      _
    %p241 = scmp.le.s32.totalorder 1, %s13
    %p242 = scmp.lt.s32.totalorder %s13, 3
    %p243 = pnand %p241, %p242
    %p244 = pneg %p243
    // Predicated region
    $region33: #{self_attention_residual_block.5} parent=5 // pred_check
      _
    $region34: #{self_attention_residual_block.5} parent=5 // pred_check_branch
      %246 = sbr.rel (%p243) target = $region36
    $region35: #{self_attention_residual_block.5} parent=5 // pred_region
      %s247 = ssub.s32 %s13, 1
      %s248 = smul.u32 2, %s23
      %p249 = scmp.lt.s32.totalorder %s22, 1
      %s250 = scalar_select %p249, %s22, 1
      %p251 = scmp.lt.s32.totalorder %s248, 1
      %s252 = scalar_select %p251, %s248, 1
      %s253 = smul.addr %s250, 2
      %s254 = sadd.s32 %s252, %s253
      %s255 = smul.addr %s254, 8
      %s256 = scalar_lea.vmem %s0, %s255
      %p257 = pneg %p53
      %p258 = pneg %p50
      %p259 = pneg %p74
      %p260 = pneg %p71
      %p261 = pneg %p95
      %p262 = pneg %p92
      %p263 = pneg %p116
      %p264 = pneg %p113
      %p265 = pneg %p144
      %p266 = pneg %p141
      %s267 = smul.u32 2, %s23
      %p268 = scmp.lt.s32.totalorder %s22, 1
      %s269 = scalar_select %p268, %s22, 1
      %p270 = scmp.lt.s32.totalorder %s267, 1
      %s271 = scalar_select %p270, %s267, 1
      %s272 = smul.addr %s269, 8
      %s273 = sadd.s32 %s271, %s272
      %s274 = smul.addr %s273, 8
      %s275 = scalar_lea.vmem %s4, %s274
      %p276 = pneg %p172
      %p277 = pneg %p169
      %s278 = smul.u32 2, %s23
      %p279 = scmp.lt.s32.totalorder %s22, 1
      %s280 = scalar_select %p279, %s22, 1
      %p281 = scmp.lt.s32.totalorder %s278, 1
      %s282 = scalar_select %p281, %s278, 1
      %s283 = smul.addr %s280, 2
      %s284 = sadd.s32 %s282, %s283
      %s285 = smul.addr %s284, 8
      %s286 = scalar_lea.vmem %s5, %s285
      %p287 = pneg %p200
      %p288 = pneg %p197
      %p289 = scmp.lt.s32.totalorder %s22, 1
      %s290 = scalar_select %p289, %s22, 1
      %p291 = scmp.lt.s32.totalorder %s23, 0
      %s292 = scalar_select %p291, %s23, 0
      %s293 = sadd.s32 %s292, %s290
      %s294 = smul.addr %s293, 8
      %s295 = scalar_lea.vmem %s6, %s294
      %s296 = smul.u32 2, %s23
      %p297 = scmp.lt.s32.totalorder %s22, 1
      %s298 = scalar_select %p297, %s22, 1
      %p299 = scmp.lt.s32.totalorder %s296, 1
      %s300 = scalar_select %p299, %s296, 1
      %s301 = smul.addr %s298, 2
      %s302 = sadd.s32 %s300, %s301
      %s303 = smul.addr %s302, 8
      %s304 = scalar_lea.vmem %s0, %s303
      %s305 = smul.u32 2, %s23
      %s306 = smul.u32 2, %s23
      %p307 = scmp.lt.s32.totalorder %s22, 1
      %s308 = scalar_select %p307, %s22, 1
      %p309 = scmp.lt.s32.totalorder %s306, 1
      %s310 = scalar_select %p309, %s306, 1
      %s311 = smul.addr %s308, 8
      %s312 = sadd.s32 %s310, %s311
      %s313 = smul.addr %s312, 8
      %s314 = scalar_lea.vmem %s4, %s313
      %s315 = smul.u32 2, %s23
      %s316 = smul.u32 2, %s23
      %p317 = scmp.lt.s32.totalorder %s22, 1
      %s318 = scalar_select %p317, %s22, 1
      %p319 = scmp.lt.s32.totalorder %s316, 1
      %s320 = scalar_select %p319, %s316, 1
      %s321 = smul.addr %s318, 2
      %s322 = sadd.s32 %s320, %s321
      %s323 = smul.addr %s322, 8
      %s324 = scalar_lea.vmem %s5, %s323
      %s325 = smul.u32 2, %s23
      %p326 = scmp.lt.s32.totalorder %s22, 1
      %s327 = scalar_select %p326, %s22, 1
      %p328 = scmp.lt.s32.totalorder %s23, 0
      %s329 = scalar_select %p328, %s23, 0
      %s330 = sadd.s32 %s329, %s327
      %s331 = smul.addr %s330, 8
      %s332 = scalar_lea.vmem %s6, %s331
      %v334 = vld [vmem:[%s304] sm:$0xff]
      %v335 = vld [vmem:[%s304 + $0x8] sm:$0xff]
      %v336 = vld [vmem:[%s1] sm:$0xff]
      %338 = vset.pattern.permute.xlu0 0
      %339 = vperm.xlu0 %338, %v336
      %v340 = vpop.permute.xlu0 %339
      %v342 = vmul.f32 %v334, %v340
      %v343 = vmul.f32 %v335, %v340
      %344 = vset.pattern.permute.xlu0 1
      %345 = vperm.xlu0 %344, %v336
      %v346 = vpop.permute.xlu0 %345
      %v348 = vadd.f32 %v342, %v346
      %v349 = vadd.f32 %v343, %v346
      %v350 = vmax.f32 %v348, 0.0
      %v351 = vmax.f32 %v349, 0.0
      %v352 = vpack.c.bf16 %v350, %v350
      %v353 = vpack.c.bf16 %v351, %v351
      %v354 = vld [vmem:[%s2] sm:$0xf]
      %v355 = vld [vmem:[%s2 + $0x4] sm:$0xf]
      %v356 = vld [vmem:[%s2 + $0x8] sm:$0xf]
      %v357 = vld [vmem:[%s2 + $0xc] sm:$0xf]
      %v362 = vunpack.c.l.b16 %v354
      %v363 = vunpack.c.l.b16 %v355
      %v364 = vunpack.c.l.b16 %v356
      %v365 = vunpack.c.l.b16 %v357
      %v366 = vpack.c.b16 %v363, %v362
      %v367 = vpack.c.b16 %v365, %v364
      %vm368 = vcmask 64512
      %v370 = vsel %vm368, %v366, 0
      %v373 = vsel %vm368, %v367, 0
      %vm375 = vcmask 1043456
      %v377 = vsel %vm375, %v352, 0
      %v380 = vsel %vm375, %v353, 0
      %382 = vmatprep.subr.bf16.mxu0 %v380
      %383 = vmatpush1.bf16.msra.mxu0 %v377
      %384 = vmatprep.subr.bf16.mxu0 0
      %385 = vmatpush1.bf16.msra.mxu0 0
      %386 = vmatprep.subr.bf16.mxu0 0
      %387 = vmatpush1.bf16.msra.mxu0 0
      %388 = vmatprep.subr.bf16.mxu0 0
      %389 = vmatpush1.bf16.msra.mxu0 0
      %390 = vmatprep.subr.bf16.mxu0 0
      %391 = vmatpush1.bf16.msra.mxu0 0
      %392 = vmatprep.subr.bf16.mxu0 0
      %393 = vmatpush1.bf16.msra.mxu0 0
      %394 = vmatprep.subr.bf16.mxu0 0
      %395 = vmatpush1.bf16.msra.mxu0 0
      %396 = vmatprep.subr.bf16.mxu0 0
      %397 = vmatpush1.bf16.msra.mxu0 0
      %398 = vmatprep.subr.bf16.mxu0 0
      %399 = vmatpush1.bf16.msra.mxu0 0
      %400 = vmatprep.subr.bf16.mxu0 0
      %401 = vmatpush1.bf16.msra.mxu0 0
      %402 = vmatprep.subr.bf16.mxu0 0
      %403 = vmatpush1.bf16.msra.mxu0 0
      %404 = vmatprep.subr.bf16.mxu0 0
      %405 = vmatpush1.bf16.msra.mxu0 0
      %406 = vmatprep.subr.bf16.mxu0 0
      %407 = vmatpush1.bf16.msra.mxu0 0
      %408 = vmatprep.subr.bf16.mxu0 0
      %409 = vmatpush1.bf16.msra.mxu0 0
      %410 = vmatprep.subr.bf16.mxu0 0
      %411 = vmatpush1.bf16.msra.mxu0 0
      %412 = vmatprep.subr.bf16.mxu0 0
      %413 = vmatpush1.bf16.msra.mxu0 0
      %414 = vmatprep.mubr.bf16.mxu0 0
      %415 = vmatmul.mubr.bf16.gmra.mrb[0].mxu0 %v370
      %v416 = vpop.f32.mrb[0].mxu0
      %v417 = vadd.f32 0.0, %v416
      %v418 = vpop.f32.mrb[0].mxu0
      %v419 = vadd.f32 0.0, %v418
      %v420 = vpop.f32.mrb[0].mxu0
      %v421 = vadd.f32 0.0, %v420
      %v422 = vpop.f32.mrb[0].mxu0
      %v423 = vadd.f32 0.0, %v422
      %424 = vmatprep.mubr.bf16.mxu0 0
      %425 = vmatmul.mubr.bf16.gmra.mrb[0].mxu0 %v373
      %v426 = vpop.f32.mrb[0].mxu0
      %v427 = vadd.f32 0.0, %v426
      %v428 = vpop.f32.mrb[0].mxu0
      %v429 = vadd.f32 0.0, %v428
      %v430 = vpop.f32.mrb[0].mxu0
      %v431 = vadd.f32 0.0, %v430
      %v432 = vpop.f32.mrb[0].mxu0
      %v433 = vadd.f32 0.0, %v432
      %434 = vdwg.mxu0
      %435 = vst [vmem:[%s314] sm:$0xff] %v417
      %436 = vst [vmem:[%s314 + $0x8] sm:$0xff] %v419
      %437 = vst [vmem:[%s314 + $0x10] sm:$0xff] %v421
      %438 = vst [vmem:[%s314 + $0x18] sm:$0xff] %v423
      %439 = vst [vmem:[%s314 + $0x20] sm:$0xff] %v427
      %440 = vst [vmem:[%s314 + $0x28] sm:$0xff] %v429
      %441 = vst [vmem:[%s314 + $0x30] sm:$0xff] %v431
      %442 = vst [vmem:[%s314 + $0x38] sm:$0xff] %v433
      %v443 = vld [vmem:[%s3] sm:$0xf]
      %v445 = vsel %vm368, %v443, 0
      %447 = vmatprep.subr.bf16.mxu0 %v380
      %448 = vmatpush1.bf16.msra.mxu0 %v377
      %449 = vmatprep.subr.bf16.mxu0 0
      %450 = vmatpush1.bf16.msra.mxu0 0
      %451 = vmatprep.subr.bf16.mxu0 0
      %452 = vmatpush1.bf16.msra.mxu0 0
      %453 = vmatprep.subr.bf16.mxu0 0
      %454 = vmatpush1.bf16.msra.mxu0 0
      %455 = vmatprep.subr.bf16.mxu0 0
      %456 = vmatpush1.bf16.msra.mxu0 0
      %457 = vmatprep.subr.bf16.mxu0 0
      %458 = vmatpush1.bf16.msra.mxu0 0
      %459 = vmatprep.subr.bf16.mxu0 0
      %460 = vmatpush1.bf16.msra.mxu0 0
      %461 = vmatprep.subr.bf16.mxu0 0
      %462 = vmatpush1.bf16.msra.mxu0 0
      %463 = vmatprep.subr.bf16.mxu0 0
      %464 = vmatpush1.bf16.msra.mxu0 0
      %465 = vmatprep.subr.bf16.mxu0 0
      %466 = vmatpush1.bf16.msra.mxu0 0
      %467 = vmatprep.subr.bf16.mxu0 0
      %468 = vmatpush1.bf16.msra.mxu0 0
      %469 = vmatprep.subr.bf16.mxu0 0
      %470 = vmatpush1.bf16.msra.mxu0 0
      %471 = vmatprep.subr.bf16.mxu0 0
      %472 = vmatpush1.bf16.msra.mxu0 0
      %473 = vmatprep.subr.bf16.mxu0 0
      %474 = vmatpush1.bf16.msra.mxu0 0
      %475 = vmatprep.subr.bf16.mxu0 0
      %476 = vmatpush1.bf16.msra.mxu0 0
      %477 = vmatprep.subr.bf16.mxu0 0
      %478 = vmatpush1.bf16.msra.mxu0 0
      %479 = vmatprep.mubr.bf16.mxu0 0
      %480 = vmatmul.mubr.bf16.gmra.mrb[0].mxu0 %v445
      %v481 = vpop.f32.mrb[0].mxu0
      %v482 = vadd.f32 0.0, %v481
      %v483 = vpop.f32.mrb[0].mxu0
      %v484 = vadd.f32 0.0, %v483
      %v485 = vpop.f32.mrb[0].mxu0
      %v486 = vpop.f32.mrb[0].mxu0
      %487 = vdwg.mxu0
      %488 = vst [vmem:[%s324] sm:$0xff] %v482
      %489 = vst [vmem:[%s324 + $0x8] sm:$0xff] %v484
      %v490 = vadd.f32 %v482, %v484
      %491 = vadd.xlane.f32.xlu0 %v490
      %v492 = vpop.xlane.xlu0 %491
      %v493 = vmul.f32 %v482, %v482
      %v494 = vmul.f32 %v484, %v484
      %v495 = vadd.f32 %v493, %v494
      %496 = vadd.xlane.f32.xlu0 %v495
      %v497 = vpop.xlane.xlu0 %496
      %vm498 = vcmask 7168
      %v499 = vsel %vm498, %v492, %v497
      %vm500 = vcmask 15360
      %501 = vst.msk [vmem:[%s332] sm:$0xff] %vm500, %v499
      %s502 = smul.u32 2, %s23
      %p503 = scmp.lt.s32.totalorder %s22, 1
      %s504 = scalar_select %p503, %s22, 1
      %p505 = scmp.lt.s32.totalorder %s502, 1
      %s506 = scalar_select %p505, %s502, 1
      %s507 = smul.addr %s504, 8
      %s508 = sadd.s32 %s506, %s507
      %s509 = smul.addr %s508, 8
      %s510 = scalar_lea.vmem %s4, %s509
      %s511 = smul.u32 2, %s23
      %p512 = scmp.lt.s32.totalorder %s22, 1
      %s513 = scalar_select %p512, %s22, 1
      %p514 = scmp.lt.s32.totalorder %s511, 1
      %s515 = scalar_select %p514, %s511, 1
      %s516 = smul.addr %s513, 2
      %s517 = sadd.s32 %s515, %s516
      %s518 = smul.addr %s517, 8
      %s519 = scalar_lea.vmem %s5, %s518
      %p520 = scmp.lt.s32.totalorder %s22, 1
      %s521 = scalar_select %p520, %s22, 1
      %p522 = scmp.lt.s32.totalorder %s23, 0
      %s523 = scalar_select %p522, %s23, 0
      %s524 = sadd.s32 %s523, %s521
      %s525 = smul.addr %s524, 8
      %s526 = scalar_lea.vmem %s6, %s525
      // Predicated region
      $region37: #{self_attention_residual_block.5} parent=35 // pred_check
        %p527 = pneg %p141
      $region38: #{self_attention_residual_block.5} parent=35 // pred_check_branch
        %529 = sbr.rel (%p527) target = $region40
      $region39: #{self_attention_residual_block.5} parent=35 // pred_region
        %s530 = smul.u32 2, %s23
      $region40: #{self_attention_residual_block.5} parent=35 // pred_fallthru
        _
      // Predicated region
      $region41: #{self_attention_residual_block.5} parent=35 // pred_check
        %p531 = pneg %p169
      $region42: #{self_attention_residual_block.5} parent=35 // pred_check_branch
        %533 = sbr.rel (%p531) target = $region44
      $region43: #{self_attention_residual_block.5} parent=35 // pred_region
        %s534 = smul.u32 2, %s23
      $region44: #{self_attention_residual_block.5} parent=35 // pred_fallthru
        _
      // Predicated region
      $region45: #{self_attention_residual_block.5} parent=35 // pred_check
        %p535 = pneg %p197
      $region46: #{self_attention_residual_block.5} parent=35 // pred_check_branch
        %537 = sbr.rel (%p535) target = $region48
      $region47: #{self_attention_residual_block.5} parent=35 // pred_region
        _
      $region48: #{self_attention_residual_block.5} parent=35 // pred_fallthru
        _
    $region36: #{self_attention_residual_block.5} parent=5 // pred_fallthru
      _
    %p538 = scmp.le.s32.totalorder 2, %s13
    // Predicated region
    $region49: #{self_attention_residual_block.5} parent=5 // pred_check
      %p539 = pneg %p538
    $region50: #{self_attention_residual_block.5} parent=5 // pred_check_branch
      %541 = sbr.rel (%p539) target = $region52
    $region51: #{self_attention_residual_block.5} parent=5 // pred_region
      %s542 = ssub.s32 %s13, 2
      // Predicated region
      $region53: #{self_attention_residual_block.5} parent=51 // pred_check
        %p543 = pneg %p147
      $region54: #{self_attention_residual_block.5} parent=51 // pred_check_branch
        %545 = sbr.rel (%p543) target = $region56
      $region55: #{self_attention_residual_block.5} parent=51 // pred_region
        %s546 = smul.u32 2, %s25
        %p547 = scmp.lt.s32.totalorder %s24, 1
        %s548 = scalar_select %p547, %s24, 1
        %p549 = scmp.lt.s32.totalorder %s546, 1
        %s550 = scalar_select %p549, %s546, 1
        %s551 = smul.addr %s548, 8
        %s552 = sadd.s32 %s550, %s551
        %s553 = smul.addr %s552, 8
        %s554 = scalar_lea.vmem %s4, %s553
      $region56: #{self_attention_residual_block.5} parent=51 // pred_fallthru
        _
      // Predicated region
      $region57: #{self_attention_residual_block.5} parent=51 // pred_check
        %p555 = pneg %p175
      $region58: #{self_attention_residual_block.5} parent=51 // pred_check_branch
        %557 = sbr.rel (%p555) target = $region60
      $region59: #{self_attention_residual_block.5} parent=51 // pred_region
        %s558 = smul.u32 2, %s25
        %p559 = scmp.lt.s32.totalorder %s24, 1
        %s560 = scalar_select %p559, %s24, 1
        %p561 = scmp.lt.s32.totalorder %s558, 1
        %s562 = scalar_select %p561, %s558, 1
        %s563 = smul.addr %s560, 2
        %s564 = sadd.s32 %s562, %s563
        %s565 = smul.addr %s564, 8
        %s566 = scalar_lea.vmem %s5, %s565
      $region60: #{self_attention_residual_block.5} parent=51 // pred_fallthru
        _
      // Predicated region
      $region61: #{self_attention_residual_block.5} parent=51 // pred_check
        %p567 = pneg %p203
      $region62: #{self_attention_residual_block.5} parent=51 // pred_check_branch
        %569 = sbr.rel (%p567) target = $region64
      $region63: #{self_attention_residual_block.5} parent=51 // pred_region
        %p570 = scmp.lt.s32.totalorder %s24, 1
        %s571 = scalar_select %p570, %s24, 1
        %p572 = scmp.lt.s32.totalorder %s25, 0
        %s573 = scalar_select %p572, %s25, 0
        %s574 = sadd.s32 %s573, %s571
        %s575 = smul.addr %s574, 8
        %s576 = scalar_lea.vmem %s6, %s575
      $region64: #{self_attention_residual_block.5} parent=51 // pred_fallthru
        _
    $region52: #{self_attention_residual_block.5} parent=5 // pred_fallthru
      _
  $region6: #{self_attention_residual_block.5} parent=0 // loop_footer
    %s17 = sadd.s32 1, %s13
  $region7: #{self_attention_residual_block.5} parent=0 // loop_footer_branch
    %12 = sbr.rel target = $region3
  $region8: #{self_attention_residual_block.5} parent=0 // loop_exit
    _

// kernel: self_attention_residual_block.6
$region0: #{self_attention_residual_block.6}
  #allocation0 [shape = 'u32[]', space=smem, size = 0x4, offset = 0x4, fixed_abs, tag = 'smem constant byte address 0x4 - core index']
  #allocation1 [shape = 'u32[144,128]{1,0:T(1,128)}', space=vmem, size = 0x12000, scoped, tag = 'internal scratch']
  %s0 = inlined_call_operand.vmem [shape: f32[2,8,256], index: 0, kind: input, shape index: {}]
  %s1 = inlined_call_operand.vmem [shape: f32[8,2], index: 1, kind: input, shape index: {}]
  %s2 = inlined_call_operand.vmem [shape: bf16[24,8], index: 2, kind: input, shape index: {}]
  %s3 = inlined_call_operand.vmem [shape: f32[9,8,1], index: 3, kind: input, shape index: {}]
  %s4 = inlined_call_operand.vmem [shape: f32[9,1,256], index: 4, kind: input, shape index: {}]
  %s5 = inlined_call_operand.vmem [shape: f32[2,8,256], index: 5, kind: output, shape index: {0}]
  %s6 = inlined_call_operand.vmem [shape: f32[2,8,2], index: 6, kind: output, shape index: {1}]
  %7 = xla_tuple %s5, %s6
  %s8 = sld [smem:[#allocation0]]
  $region61: #{self_attention_residual_block.6} parent=0
    _
  %s10 = ssub.s32 1, %s8
  %s11 = scalar_select 0, %s10, %s8
  loop: start=0, step=1, limit=4
  $region2: #{self_attention_residual_block.6} parent=0 // loop_pre_header
    _
  $region3: #{self_attention_residual_block.6} parent=0 // loop_header
    %s13 = sphi 0, %s17
    %p14 = scmp.ge.s32.totalorder %s13, 4
    %s23 = sphi 0, %s25
    %s26 = sphi 0, %s23
    %s27 = sphi 0, %s26
    %s43 = sphi 0, %s27
    %s47 = sphi 0, %s47
    %s49 = sphi 0, %s47
    %s50 = sphi 0, %s49
    %s64 = sphi 0, %s50
    %s68 = sphi 0, %s68
    %s70 = sphi 0, %s68
    %s71 = sphi 0, %s70
    %s85 = sphi 0, %s71
    %s89 = sphi 0, %s89
    %s91 = sphi 0, %s89
    %s92 = sphi 0, %s91
    %s106 = sphi 0, %s92
    %s110 = sphi 0, %s110
    %s112 = sphi 0, %s110
    %s113 = sphi 0, %s112
    %s127 = sphi 0, %s113
    %s133 = sphi 0, %s135
    %s136 = sphi 0, %s133
    %s137 = sphi 0, %s136
    %s153 = sphi 0, %s137
    %s159 = sphi 0, %s161
    %s162 = sphi 0, %s159
    %s163 = sphi 0, %s162
    %s179 = sphi 0, %s163
  $region4: #{self_attention_residual_block.6} parent=0 // loop_header_branch
    %16 = sbr.rel (%p14) target = $region8
  $region5: #{self_attention_residual_block.6} parent=0 // loop_body
    %s18 = ssub.s32 %s13, 1
    %s19 = ssub.s32 %s13, 2
    %s20 = sadd.s32 %s13, 1
    %s21 = ssub.s32 %s13, %s20
    %p22 = scmp.eq.s32.totalorder %s21, 0
    %s24 = sadd.s32 %s23, 1
    %s25 = scalar_select %p22, %s23, %s24
    %p28 = pneg %p22
    %p29 = scmp.eq.s32.totalorder %s13, 1
    %p30 = por %p28, %p29
    %p31 = scmp.ne.s32.totalorder %s23, %s26
    %p32 = scmp.eq.s32.totalorder %s13, 0
    %p33 = por %p31, %p32
    %p34 = scmp.ne.s32.totalorder %s23, %s26
    %p35 = scmp.eq.s32.totalorder %s18, 1
    %p36 = por %p34, %p35
    %p37 = scmp.ne.s32.totalorder %s26, %s27
    %p38 = scmp.eq.s32.totalorder %s18, 0
    %p39 = por %p37, %p38
    %p40 = scmp.ne.s32.totalorder %s26, %s27
    %p41 = scmp.eq.s32.totalorder %s19, 1
    %p42 = por %p40, %p41
    %p44 = scmp.ne.s32.totalorder %s27, %s43
    %p45 = scmp.eq.s32.totalorder %s19, 0
    %p46 = por %p44, %p45
    %s48 = sadd.s32 %s47, 1
    %p51 = scmp.eq.s32.totalorder %s13, 1
    %p52 = scmp.ne.s32.totalorder %s47, %s49
    %p53 = scmp.eq.s32.totalorder %s13, 0
    %p54 = por %p52, %p53
    %p55 = scmp.ne.s32.totalorder %s47, %s49
    %p56 = scmp.eq.s32.totalorder %s18, 1
    %p57 = por %p55, %p56
    %p58 = scmp.ne.s32.totalorder %s49, %s50
    %p59 = scmp.eq.s32.totalorder %s18, 0
    %p60 = por %p58, %p59
    %p61 = scmp.ne.s32.totalorder %s49, %s50
    %p62 = scmp.eq.s32.totalorder %s19, 1
    %p63 = por %p61, %p62
    %p65 = scmp.ne.s32.totalorder %s50, %s64
    %p66 = scmp.eq.s32.totalorder %s19, 0
    %p67 = por %p65, %p66
    %s69 = sadd.s32 %s68, 1
    %p72 = scmp.eq.s32.totalorder %s13, 1
    %p73 = scmp.ne.s32.totalorder %s68, %s70
    %p74 = scmp.eq.s32.totalorder %s13, 0
    %p75 = por %p73, %p74
    %p76 = scmp.ne.s32.totalorder %s68, %s70
    %p77 = scmp.eq.s32.totalorder %s18, 1
    %p78 = por %p76, %p77
    %p79 = scmp.ne.s32.totalorder %s70, %s71
    %p80 = scmp.eq.s32.totalorder %s18, 0
    %p81 = por %p79, %p80
    %p82 = scmp.ne.s32.totalorder %s70, %s71
    %p83 = scmp.eq.s32.totalorder %s19, 1
    %p84 = por %p82, %p83
    %p86 = scmp.ne.s32.totalorder %s71, %s85
    %p87 = scmp.eq.s32.totalorder %s19, 0
    %p88 = por %p86, %p87
    %s90 = sadd.s32 %s89, 1
    %p93 = scmp.eq.s32.totalorder %s13, 1
    %p94 = scmp.ne.s32.totalorder %s89, %s91
    %p95 = scmp.eq.s32.totalorder %s13, 0
    %p96 = por %p94, %p95
    %p97 = scmp.ne.s32.totalorder %s89, %s91
    %p98 = scmp.eq.s32.totalorder %s18, 1
    %p99 = por %p97, %p98
    %p100 = scmp.ne.s32.totalorder %s91, %s92
    %p101 = scmp.eq.s32.totalorder %s18, 0
    %p102 = por %p100, %p101
    %p103 = scmp.ne.s32.totalorder %s91, %s92
    %p104 = scmp.eq.s32.totalorder %s19, 1
    %p105 = por %p103, %p104
    %p107 = scmp.ne.s32.totalorder %s92, %s106
    %p108 = scmp.eq.s32.totalorder %s19, 0
    %p109 = por %p107, %p108
    %s111 = sadd.s32 %s110, 1
    %p114 = scmp.eq.s32.totalorder %s13, 1
    %p115 = scmp.ne.s32.totalorder %s110, %s112
    %p116 = scmp.eq.s32.totalorder %s13, 0
    %p117 = por %p115, %p116
    %p118 = scmp.ne.s32.totalorder %s110, %s112
    %p119 = scmp.eq.s32.totalorder %s18, 1
    %p120 = por %p118, %p119
    %p121 = scmp.ne.s32.totalorder %s112, %s113
    %p122 = scmp.eq.s32.totalorder %s18, 0
    %p123 = por %p121, %p122
    %p124 = scmp.ne.s32.totalorder %s112, %s113
    %p125 = scmp.eq.s32.totalorder %s19, 1
    %p126 = por %p124, %p125
    %p128 = scmp.ne.s32.totalorder %s113, %s127
    %p129 = scmp.eq.s32.totalorder %s19, 0
    %p130 = por %p128, %p129
    %s131 = ssub.s32 %s13, %s20
    %p132 = scmp.eq.s32.totalorder %s131, 0
    %s134 = sadd.s32 %s133, 1
    %s135 = scalar_select %p132, %s133, %s134
    %p138 = pneg %p132
    %p139 = scmp.eq.s32.totalorder %s13, 1
    %p140 = por %p138, %p139
    %p141 = scmp.ne.s32.totalorder %s133, %s136
    %p142 = scmp.eq.s32.totalorder %s13, 0
    %p143 = por %p141, %p142
    %p144 = scmp.ne.s32.totalorder %s133, %s136
    %p145 = scmp.eq.s32.totalorder %s18, 1
    %p146 = por %p144, %p145
    %p147 = scmp.ne.s32.totalorder %s136, %s137
    %p148 = scmp.eq.s32.totalorder %s18, 0
    %p149 = por %p147, %p148
    %p150 = scmp.ne.s32.totalorder %s136, %s137
    %p151 = scmp.eq.s32.totalorder %s19, 1
    %p152 = por %p150, %p151
    %p154 = scmp.ne.s32.totalorder %s137, %s153
    %p155 = scmp.eq.s32.totalorder %s19, 0
    %p156 = por %p154, %p155
    %s157 = ssub.s32 %s13, %s20
    %p158 = scmp.eq.s32.totalorder %s157, 0
    %s160 = sadd.s32 %s159, 1
    %s161 = scalar_select %p158, %s159, %s160
    %p164 = pneg %p158
    %p165 = scmp.eq.s32.totalorder %s13, 1
    %p166 = por %p164, %p165
    %p167 = scmp.ne.s32.totalorder %s159, %s162
    %p168 = scmp.eq.s32.totalorder %s13, 0
    %p169 = por %p167, %p168
    %p170 = scmp.ne.s32.totalorder %s159, %s162
    %p171 = scmp.eq.s32.totalorder %s18, 1
    %p172 = por %p170, %p171
    %p173 = scmp.ne.s32.totalorder %s162, %s163
    %p174 = scmp.eq.s32.totalorder %s18, 0
    %p175 = por %p173, %p174
    %p176 = scmp.ne.s32.totalorder %s162, %s163
    %p177 = scmp.eq.s32.totalorder %s19, 1
    %p178 = por %p176, %p177
    %p180 = scmp.ne.s32.totalorder %s163, %s179
    %p181 = scmp.eq.s32.totalorder %s19, 0
    %p182 = por %p180, %p181
    %p183 = scmp.le.s32.totalorder 1, %s13
    %p184 = scmp.lt.s32.totalorder %s13, 3
    %p185 = pnand %p183, %p184
    %p186 = pneg %p185
    // Predicated region
    $region9: #{self_attention_residual_block.6} parent=5 // pred_check
      _
    $region10: #{self_attention_residual_block.6} parent=5 // pred_check_branch
      %188 = sbr.rel (%p185) target = $region12
    $region11: #{self_attention_residual_block.6} parent=5 // pred_region
      %s189 = ssub.s32 %s13, 1
      // Predicated region
      $region13: #{self_attention_residual_block.6} parent=11 // pred_check
        %p190 = pneg %p60
      $region14: #{self_attention_residual_block.6} parent=11 // pred_check_branch
        %192 = sbr.rel (%p190) target = $region16
      $region15: #{self_attention_residual_block.6} parent=11 // pred_region
        _
      $region16: #{self_attention_residual_block.6} parent=11 // pred_fallthru
        _
      // Predicated region
      $region17: #{self_attention_residual_block.6} parent=11 // pred_check
        %p193 = pneg %p81
      $region18: #{self_attention_residual_block.6} parent=11 // pred_check_branch
        %195 = sbr.rel (%p193) target = $region20
      $region19: #{self_attention_residual_block.6} parent=11 // pred_region
        _
      $region20: #{self_attention_residual_block.6} parent=11 // pred_fallthru
        _
      // Predicated region
      $region21: #{self_attention_residual_block.6} parent=11 // pred_check
        %p196 = pneg %p102
      $region22: #{self_attention_residual_block.6} parent=11 // pred_check_branch
        %198 = sbr.rel (%p196) target = $region24
      $region23: #{self_attention_residual_block.6} parent=11 // pred_region
        _
      $region24: #{self_attention_residual_block.6} parent=11 // pred_fallthru
        _
      // Predicated region
      $region25: #{self_attention_residual_block.6} parent=11 // pred_check
        %p199 = pneg %p123
      $region26: #{self_attention_residual_block.6} parent=11 // pred_check_branch
        %201 = sbr.rel (%p199) target = $region28
      $region27: #{self_attention_residual_block.6} parent=11 // pred_region
        _
      $region28: #{self_attention_residual_block.6} parent=11 // pred_fallthru
        _
    $region12: #{self_attention_residual_block.6} parent=5 // pred_fallthru
      _
    %p202 = scmp.lt.s32.totalorder %s13, 2
    // Predicated region
    $region29: #{self_attention_residual_block.6} parent=5 // pred_check
      %p203 = pneg %p202
    $region30: #{self_attention_residual_block.6} parent=5 // pred_check_branch
      %205 = sbr.rel (%p203) target = $region32
    $region31: #{self_attention_residual_block.6} parent=5 // pred_region
      // Predicated region
      $region33: #{self_attention_residual_block.6} parent=31 // pred_check
        %p206 = pneg %p33
      $region34: #{self_attention_residual_block.6} parent=31 // pred_check_branch
        %208 = sbr.rel (%p206) target = $region36
      $region35: #{self_attention_residual_block.6} parent=31 // pred_region
        %p209 = scmp.lt.s32.totalorder %s13, 1
        %s210 = scalar_select %p209, %s13, 1
        %s211 = smul.addr %s210, 2
        %s212 = smul.addr %s211, 8
        %s213 = scalar_lea.vmem %s0, %s212
      $region36: #{self_attention_residual_block.6} parent=31 // pred_fallthru
        _
    $region32: #{self_attention_residual_block.6} parent=5 // pred_fallthru
      _
    %p214 = scmp.le.s32.totalorder 1, %s13
    %p215 = scmp.lt.s32.totalorder %s13, 3
    %p216 = pnand %p214, %p215
    %p217 = pneg %p216
    // Predicated region
    $region37: #{self_attention_residual_block.6} parent=5 // pred_check
      _
    $region38: #{self_attention_residual_block.6} parent=5 // pred_check_branch
      %219 = sbr.rel (%p216) target = $region40
    $region39: #{self_attention_residual_block.6} parent=5 // pred_region
      %s220 = ssub.s32 %s13, 1
      %p221 = scmp.lt.s32.totalorder %s18, 1
      %s222 = scalar_select %p221, %s18, 1
      %s223 = smul.addr %s222, 2
      %s224 = smul.addr %s223, 8
      %s225 = scalar_lea.vmem %s0, %s224
      %p226 = pneg %p39
      %p227 = pneg %p36
      %p228 = pneg %p60
      %p229 = pneg %p57
      %p230 = pneg %p81
      %p231 = pneg %p78
      %p232 = pneg %p102
      %p233 = pneg %p99
      %p234 = pneg %p123
      %p235 = pneg %p120
      %p236 = pneg %p149
      %p237 = pneg %p146
      %p238 = scmp.lt.s32.totalorder %s18, 1
      %s239 = scalar_select %p238, %s18, 1
      %s240 = smul.addr %s239, 2
      %s241 = smul.addr %s240, 8
      %s242 = scalar_lea.vmem %s5, %s241
      %p243 = pneg %p175
      %p244 = pneg %p172
      %p245 = scmp.lt.s32.totalorder %s18, 1
      %s246 = scalar_select %p245, %s18, 1
      %s247 = smul.addr %s246, 8
      %s248 = scalar_lea.vmem %s6, %s247
      %p249 = scmp.lt.s32.totalorder %s18, 1
      %s250 = scalar_select %p249, %s18, 1
      %s251 = smul.addr %s250, 2
      %s252 = smul.addr %s251, 8
      %s253 = scalar_lea.vmem %s0, %s252
      %p254 = scmp.lt.s32.totalorder %s18, 1
      %s255 = scalar_select %p254, %s18, 1
      %s256 = smul.addr %s255, 2
      %s257 = smul.addr %s256, 8
      %s258 = scalar_lea.vmem %s5, %s257
      %p259 = scmp.lt.s32.totalorder %s18, 1
      %s260 = scalar_select %p259, %s18, 1
      %s261 = smul.addr %s260, 8
      %s262 = scalar_lea.vmem %s6, %s261
      %v264 = vld [vmem:[%s253] sm:$0xff]
      %v265 = vld [vmem:[%s253 + $0x8] sm:$0xff]
      %v266 = vld [vmem:[%s1] sm:$0xff]
      %268 = vset.pattern.permute.xlu0 0
      %269 = vperm.xlu0 %268, %v266
      %v270 = vpop.permute.xlu0 %269
      %v272 = vmul.f32 %v264, %v270
      %v273 = vmul.f32 %v265, %v270
      %274 = vset.pattern.permute.xlu0 1
      %275 = vperm.xlu0 %274, %v266
      %v276 = vpop.permute.xlu0 %275
      %v278 = vadd.f32 %v272, %v276
      %v279 = vadd.f32 %v273, %v276
      %v280 = vmax.f32 %v278, 0.0
      %v281 = vmax.f32 %v279, 0.0
      %v282 = vld [vmem:[%s2] sm:$0xf]
      %v283 = vld [vmem:[%s2 + $0x4] sm:$0xf]
      %v284 = vld [vmem:[%s2 + $0x8] sm:$0xf]
      %v285 = vpack.c.bf16 %v280, %v280
      %v286 = vpack.c.bf16 %v281, %v281
      %v290 = vunpack.c.l.b16 %v282
      %v291 = vunpack.c.l.b16 %v283
      %v292 = vunpack.c.l.b16 %v284
      %v293 = vpack.c.b16 %v291, %v290
      %v294 = vpack.c.b16 %v292, %v292
      %vm295 = vcmask 64512
      %v297 = vsel %vm295, %v293, 0
      %v300 = vsel %vm295, %v294, 0
      %vm302 = vcmask 1043456
      %v304 = vsel %vm302, %v285, 0
      %v307 = vsel %vm302, %v286, 0
      %309 = vmatprep.subr.bf16.mxu0 %v307
      %310 = vmatpush1.bf16.msra.mxu0 %v304
      %311 = vmatprep.subr.bf16.mxu0 0
      %312 = vmatpush1.bf16.msra.mxu0 0
      %313 = vmatprep.subr.bf16.mxu0 0
      %314 = vmatpush1.bf16.msra.mxu0 0
      %315 = vmatprep.subr.bf16.mxu0 0
      %316 = vmatpush1.bf16.msra.mxu0 0
      %317 = vmatprep.subr.bf16.mxu0 0
      %318 = vmatpush1.bf16.msra.mxu0 0
      %319 = vmatprep.subr.bf16.mxu0 0
      %320 = vmatpush1.bf16.msra.mxu0 0
      %321 = vmatprep.subr.bf16.mxu0 0
      %322 = vmatpush1.bf16.msra.mxu0 0
      %323 = vmatprep.subr.bf16.mxu0 0
      %324 = vmatpush1.bf16.msra.mxu0 0
      %325 = vmatprep.subr.bf16.mxu0 0
      %326 = vmatpush1.bf16.msra.mxu0 0
      %327 = vmatprep.subr.bf16.mxu0 0
      %328 = vmatpush1.bf16.msra.mxu0 0
      %329 = vmatprep.subr.bf16.mxu0 0
      %330 = vmatpush1.bf16.msra.mxu0 0
      %331 = vmatprep.subr.bf16.mxu0 0
      %332 = vmatpush1.bf16.msra.mxu0 0
      %333 = vmatprep.subr.bf16.mxu0 0
      %334 = vmatpush1.bf16.msra.mxu0 0
      %335 = vmatprep.subr.bf16.mxu0 0
      %336 = vmatpush1.bf16.msra.mxu0 0
      %337 = vmatprep.subr.bf16.mxu0 0
      %338 = vmatpush1.bf16.msra.mxu0 0
      %339 = vmatprep.subr.bf16.mxu0 0
      %340 = vmatpush1.bf16.msra.mxu0 0
      %341 = vmatprep.mubr.bf16.mxu0 0
      %342 = vmatmul.mubr.bf16.gmra.mrb[0].mxu0 %v297
      %v343 = vpop.f32.mrb[0].mxu0
      %v344 = vadd.f32 0.0, %v343
      %v345 = vpop.f32.mrb[0].mxu0
      %v346 = vadd.f32 0.0, %v345
      %v347 = vpop.f32.mrb[0].mxu0
      %v348 = vadd.f32 0.0, %v347
      %v349 = vpop.f32.mrb[0].mxu0
      %v350 = vadd.f32 0.0, %v349
      %351 = vmatprep.mubr.bf16.mxu0 0
      %352 = vmatmul.mubr.bf16.gmra.mrb[0].mxu0 %v300
      %v353 = vpop.f32.mrb[0].mxu0
      %v354 = vadd.f32 0.0, %v353
      %v355 = vpop.f32.mrb[0].mxu0
      %v356 = vadd.f32 0.0, %v355
      %v357 = vpop.f32.mrb[0].mxu0
      %v358 = vpop.f32.mrb[0].mxu0
      %359 = vdwg.mxu0
      %360 = vrot.lane.b32.xlu0 %v348, 17
      %v361 = vpop.permute.xlu0 %360
      %362 = vrot.lane.b32.xlu0 %v350, 17
      %v363 = vpop.permute.xlu0 %362
      %v364 = vlaneseq
      %v365 = vand.u32 %v364, 127
      %vm366 = vcmp.lt.s32.totalorder %v365, 17
      %v367 = vsel %vm366, %v361, %v363
      %v368 = vsel %vm366, %v363, %v361
      %v369 = vld [vmem:[%s4] sm:$0x3]
      %v371 = vlaneseq
      %v372 = vshrl.u32 %v371, 7
      %v373 = vsub.s32 0, %v372
      %v374 = vrot.slane %v369, %v373
      %v375 = vlaneseq
      %v376 = vshrl.u32 %v375, 7
      %v377 = vsub.s32 1, %v376
      %v378 = vrot.slane %v369, %v377
      %v381 = vmul.f32 %v368, %v374
      %v382 = vmul.f32 %v367, %v378
      %v383 = vld [vmem:[%s3] sm:$0xff]
      %385 = vset.pattern.permute.xlu0 0
      %386 = vperm.xlu0 %385, %v383
      %v387 = vpop.permute.xlu0 %386
      %v389 = vadd.f32 %v381, %v387
      %v390 = vadd.f32 %v382, %v387
      %v391 = vmul.f32 %v344, %v389
      %v392 = vmul.f32 %v346, %v390
      %393 = vrot.lane.b32.xlu0 %v348, 16
      %v394 = vpop.permute.xlu0 %393
      %395 = vrot.lane.b32.xlu0 %v350, 16
      %v396 = vpop.permute.xlu0 %395
      %vm397 = vcmp.lt.s32.totalorder %v365, 16
      %v398 = vsel %vm397, %v394, %v396
      %v399 = vsel %vm397, %v396, %v394
      %s400 = scalar_lea.vmem %s4, 2
      %v401 = vld [vmem:[%s400] sm:$0x3]
      %v403 = vlaneseq
      %v404 = vshrl.u32 %v403, 7
      %v405 = vsub.s32 0, %v404
      %v406 = vrot.slane %v401, %v405
      %v407 = vlaneseq
      %v408 = vshrl.u32 %v407, 7
      %v409 = vsub.s32 1, %v408
      %v410 = vrot.slane %v401, %v409
      %v413 = vmul.f32 %v399, %v406
      %v414 = vmul.f32 %v398, %v410
      %s415 = scalar_lea.vmem %s3, 8
      %v416 = vld [vmem:[%s415] sm:$0xff]
      %418 = vset.pattern.permute.xlu0 0
      %419 = vperm.xlu0 %418, %v416
      %v420 = vpop.permute.xlu0 %419
      %v422 = vadd.f32 %v413, %v420
      %v423 = vadd.f32 %v414, %v420
      %v424 = vmul.f32 %v344, %v422
      %v425 = vmul.f32 %v346, %v423
      %v426 = vmax.f32 %v391, %v424
      %v427 = vmax.f32 %v392, %v425
      %428 = vrot.lane.b32.xlu0 %v348, 15
      %v429 = vpop.permute.xlu0 %428
      %430 = vrot.lane.b32.xlu0 %v350, 15
      %v431 = vpop.permute.xlu0 %430
      %vm432 = vcmp.lt.s32.totalorder %v365, 15
      %v433 = vsel %vm432, %v429, %v431
      %v434 = vsel %vm432, %v431, %v429
      %s435 = scalar_lea.vmem %s4, 4
      %v436 = vld [vmem:[%s435] sm:$0x3]
      %v438 = vlaneseq
      %v439 = vshrl.u32 %v438, 7
      %v440 = vsub.s32 0, %v439
      %v441 = vrot.slane %v436, %v440
      %v442 = vlaneseq
      %v443 = vshrl.u32 %v442, 7
      %v444 = vsub.s32 1, %v443
      %v445 = vrot.slane %v436, %v444
      %v448 = vmul.f32 %v434, %v441
      %v449 = vmul.f32 %v433, %v445
      %s450 = scalar_lea.vmem %s3, 16
      %v451 = vld [vmem:[%s450] sm:$0xff]
      %453 = vset.pattern.permute.xlu0 0
      %454 = vperm.xlu0 %453, %v451
      %v455 = vpop.permute.xlu0 %454
      %v457 = vadd.f32 %v448, %v455
      %v458 = vadd.f32 %v449, %v455
      %v459 = vmul.f32 %v344, %v457
      %v460 = vmul.f32 %v346, %v458
      %v461 = vmax.f32 %v426, %v459
      %v462 = vmax.f32 %v427, %v460
      %463 = vrot.lane.b32.xlu0 %v348, 1
      %v464 = vpop.permute.xlu0 %463
      %465 = vrot.lane.b32.xlu0 %v350, 1
      %v466 = vpop.permute.xlu0 %465
      %vm467 = vcmp.lt.s32.totalorder %v365, 1
      %v468 = vsel %vm467, %v464, %v466
      %v469 = vsel %vm467, %v466, %v464
      %s470 = scalar_lea.vmem %s4, 6
      %v471 = vld [vmem:[%s470] sm:$0x3]
      %v473 = vlaneseq
      %v474 = vshrl.u32 %v473, 7
      %v475 = vsub.s32 0, %v474
      %v476 = vrot.slane %v471, %v475
      %v477 = vlaneseq
      %v478 = vshrl.u32 %v477, 7
      %v479 = vsub.s32 1, %v478
      %v480 = vrot.slane %v471, %v479
      %v483 = vmul.f32 %v469, %v476
      %v484 = vmul.f32 %v468, %v480
      %s485 = scalar_lea.vmem %s3, 24
      %v486 = vld [vmem:[%s485] sm:$0xff]
      %488 = vset.pattern.permute.xlu0 0
      %489 = vperm.xlu0 %488, %v486
      %v490 = vpop.permute.xlu0 %489
      %v492 = vadd.f32 %v483, %v490
      %v493 = vadd.f32 %v484, %v490
      %v494 = vmul.f32 %v344, %v492
      %v495 = vmul.f32 %v346, %v493
      %v496 = vmax.f32 %v461, %v494
      %v497 = vmax.f32 %v462, %v495
      %s498 = scalar_lea.vmem %s4, 8
      %v499 = vld [vmem:[%s498] sm:$0x3]
      %v501 = vlaneseq
      %v502 = vshrl.u32 %v501, 7
      %v503 = vsub.s32 0, %v502
      %v504 = vrot.slane %v499, %v503
      %v505 = vlaneseq
      %v506 = vshrl.u32 %v505, 7
      %v507 = vsub.s32 1, %v506
      %v508 = vrot.slane %v499, %v507
      %v511 = vmul.f32 %v348, %v504
      %v512 = vmul.f32 %v350, %v508
      %s513 = scalar_lea.vmem %s3, 32
      %v514 = vld [vmem:[%s513] sm:$0xff]
      %516 = vset.pattern.permute.xlu0 0
      %517 = vperm.xlu0 %516, %v514
      %v518 = vpop.permute.xlu0 %517
      %v520 = vadd.f32 %v511, %v518
      %v521 = vadd.f32 %v512, %v518
      %v522 = vmul.f32 %v344, %v520
      %v523 = vmul.f32 %v346, %v521
      %v524 = vmax.f32 %v496, %v522
      %v525 = vmax.f32 %v497, %v523
      %526 = vrot.lane.b32.xlu0 %v348, 127
      %v527 = vpop.permute.xlu0 %526
      %528 = vrot.lane.b32.xlu0 %v350, 127
      %v529 = vpop.permute.xlu0 %528
      %vm530 = vcmp.lt.s32.totalorder %v365, 127
      %v531 = vsel %vm530, %v527, %v529
      %v532 = vsel %vm530, %v529, %v527
      %s533 = scalar_lea.vmem %s4, 10
      %v534 = vld [vmem:[%s533] sm:$0x3]
      %v536 = vlaneseq
      %v537 = vshrl.u32 %v536, 7
      %v538 = vsub.s32 0, %v537
      %v539 = vrot.slane %v534, %v538
      %v540 = vlaneseq
      %v541 = vshrl.u32 %v540, 7
      %v542 = vsub.s32 1, %v541
      %v543 = vrot.slane %v534, %v542
      %v546 = vmul.f32 %v531, %v539
      %v547 = vmul.f32 %v532, %v543
      %s548 = scalar_lea.vmem %s3, 40
      %v549 = vld [vmem:[%s548] sm:$0xff]
      %551 = vset.pattern.permute.xlu0 0
      %552 = vperm.xlu0 %551, %v549
      %v553 = vpop.permute.xlu0 %552
      %v555 = vadd.f32 %v546, %v553
      %v556 = vadd.f32 %v547, %v553
      %v557 = vmul.f32 %v344, %v555
      %v558 = vmul.f32 %v346, %v556
      %v559 = vmax.f32 %v524, %v557
      %v560 = vmax.f32 %v525, %v558
      %561 = vrot.lane.b32.xlu0 %v348, 113
      %v562 = vpop.permute.xlu0 %561
      %563 = vrot.lane.b32.xlu0 %v350, 113
      %v564 = vpop.permute.xlu0 %563
      %vm565 = vcmp.lt.s32.totalorder %v365, 113
      %v566 = vsel %vm565, %v562, %v564
      %v567 = vsel %vm565, %v564, %v562
      %s568 = scalar_lea.vmem %s4, 12
      %v569 = vld [vmem:[%s568] sm:$0x3]
      %v571 = vlaneseq
      %v572 = vshrl.u32 %v571, 7
      %v573 = vsub.s32 0, %v572
      %v574 = vrot.slane %v569, %v573
      %v575 = vlaneseq
      %v576 = vshrl.u32 %v575, 7
      %v577 = vsub.s32 1, %v576
      %v578 = vrot.slane %v569, %v577
      %v581 = vmul.f32 %v566, %v574
      %v582 = vmul.f32 %v567, %v578
      %s583 = scalar_lea.vmem %s3, 48
      %v584 = vld [vmem:[%s583] sm:$0xff]
      %586 = vset.pattern.permute.xlu0 0
      %587 = vperm.xlu0 %586, %v584
      %v588 = vpop.permute.xlu0 %587
      %v590 = vadd.f32 %v581, %v588
      %v591 = vadd.f32 %v582, %v588
      %v592 = vmul.f32 %v344, %v590
      %v593 = vmul.f32 %v346, %v591
      %v594 = vmax.f32 %v559, %v592
      %v595 = vmax.f32 %v560, %v593
      %596 = vrot.lane.b32.xlu0 %v348, 112
      %v597 = vpop.permute.xlu0 %596
      %598 = vrot.lane.b32.xlu0 %v350, 112
      %v599 = vpop.permute.xlu0 %598
      %vm600 = vcmp.lt.s32.totalorder %v365, 112
      %v601 = vsel %vm600, %v597, %v599
      %v602 = vsel %vm600, %v599, %v597
      %s603 = scalar_lea.vmem %s4, 14
      %v604 = vld [vmem:[%s603] sm:$0x3]
      %v606 = vlaneseq
      %v607 = vshrl.u32 %v606, 7
      %v608 = vsub.s32 0, %v607
      %v609 = vrot.slane %v604, %v608
      %v610 = vlaneseq
      %v611 = vshrl.u32 %v610, 7
      %v612 = vsub.s32 1, %v611
      %v613 = vrot.slane %v604, %v612
      %v616 = vmul.f32 %v601, %v609
      %v617 = vmul.f32 %v602, %v613
      %s618 = scalar_lea.vmem %s3, 56
      %v619 = vld [vmem:[%s618] sm:$0xff]
      %621 = vset.pattern.permute.xlu0 0
      %622 = vperm.xlu0 %621, %v619
      %v623 = vpop.permute.xlu0 %622
      %v625 = vadd.f32 %v616, %v623
      %v626 = vadd.f32 %v617, %v623
      %v627 = vmul.f32 %v344, %v625
      %v628 = vmul.f32 %v346, %v626
      %v629 = vmax.f32 %v594, %v627
      %v630 = vmax.f32 %v595, %v628
      %631 = vrot.lane.b32.xlu0 %v348, 111
      %v632 = vpop.permute.xlu0 %631
      %633 = vrot.lane.b32.xlu0 %v350, 111
      %v634 = vpop.permute.xlu0 %633
      %vm635 = vcmp.lt.s32.totalorder %v365, 111
      %v636 = vsel %vm635, %v632, %v634
      %v637 = vsel %vm635, %v634, %v632
      %s638 = scalar_lea.vmem %s4, 16
      %v639 = vld [vmem:[%s638] sm:$0x3]
      %v641 = vlaneseq
      %v642 = vshrl.u32 %v641, 7
      %v643 = vsub.s32 0, %v642
      %v644 = vrot.slane %v639, %v643
      %v645 = vlaneseq
      %v646 = vshrl.u32 %v645, 7
      %v647 = vsub.s32 1, %v646
      %v648 = vrot.slane %v639, %v647
      %v651 = vmul.f32 %v636, %v644
      %v652 = vmul.f32 %v637, %v648
      %s653 = scalar_lea.vmem %s3, 64
      %v654 = vld [vmem:[%s653] sm:$0xff]
      %656 = vset.pattern.permute.xlu0 0
      %657 = vperm.xlu0 %656, %v654
      %v658 = vpop.permute.xlu0 %657
      %v660 = vadd.f32 %v651, %v658
      %v661 = vadd.f32 %v652, %v658
      %v662 = vmul.f32 %v344, %v660
      %v663 = vmul.f32 %v346, %v661
      %v664 = vmax.f32 %v629, %v662
      %v665 = vmax.f32 %v630, %v663
      %v666 = vsub.f32 %v391, %v664
      %v667 = vsub.f32 %v392, %v665
      %v668 = vmul.f32 %v666, 1.442695
      %v669 = vpow.pop %v668
      %v670 = vmul.f32 %v667, 1.442695
      %v671 = vpow.pop %v670
      %v672 = vadd.f32 %v669, 0.0
      %v673 = vadd.f32 %v671, 0.0
      %674 = vrot.lane.b32.xlu0 %v354, 17
      %v675 = vpop.permute.xlu0 %674
      %676 = vrot.lane.b32.xlu0 %v356, 17
      %v677 = vpop.permute.xlu0 %676
      %v678 = vsel %vm366, %v675, %v677
      %v679 = vsel %vm366, %v677, %v675
      %v680 = vmul.f32 %v679, %v374
      %v681 = vmul.f32 %v678, %v378
      %v682 = vmul.f32 %v669, %v680
      %v683 = vmul.f32 %v671, %v681
      %v684 = vadd.f32 %v682, 0.0
      %v685 = vadd.f32 %v683, 0.0
      %v686 = vsub.f32 %v424, %v664
      %v687 = vsub.f32 %v425, %v665
      %v688 = vmul.f32 %v686, 1.442695
      %v689 = vpow.pop %v688
      %v690 = vmul.f32 %v687, 1.442695
      %v691 = vpow.pop %v690
      %v692 = vadd.f32 %v672, %v689
      %v693 = vadd.f32 %v673, %v691
      %694 = vrot.lane.b32.xlu0 %v354, 16
      %v695 = vpop.permute.xlu0 %694
      %696 = vrot.lane.b32.xlu0 %v356, 16
      %v697 = vpop.permute.xlu0 %696
      %v698 = vsel %vm397, %v695, %v697
      %v699 = vsel %vm397, %v697, %v695
      %v700 = vmul.f32 %v699, %v406
      %v701 = vmul.f32 %v698, %v410
      %v702 = vmul.f32 %v689, %v700
      %v703 = vmul.f32 %v691, %v701
      %v704 = vadd.f32 %v684, %v702
      %v705 = vadd.f32 %v685, %v703
      %v706 = vsub.f32 %v459, %v664
      %v707 = vsub.f32 %v460, %v665
      %v708 = vmul.f32 %v706, 1.442695
      %v709 = vpow.pop %v708
      %v710 = vmul.f32 %v707, 1.442695
      %v711 = vpow.pop %v710
      %v712 = vadd.f32 %v692, %v709
      %v713 = vadd.f32 %v693, %v711
      %714 = vrot.lane.b32.xlu0 %v354, 15
      %v715 = vpop.permute.xlu0 %714
      %716 = vrot.lane.b32.xlu0 %v356, 15
      %v717 = vpop.permute.xlu0 %716
      %v718 = vsel %vm432, %v715, %v717
      %v719 = vsel %vm432, %v717, %v715
      %v720 = vmul.f32 %v719, %v441
      %v721 = vmul.f32 %v718, %v445
      %v722 = vmul.f32 %v709, %v720
      %v723 = vmul.f32 %v711, %v721
      %v724 = vadd.f32 %v704, %v722
      %v725 = vadd.f32 %v705, %v723
      %v726 = vsub.f32 %v494, %v664
      %v727 = vsub.f32 %v495, %v665
      %v728 = vmul.f32 %v726, 1.442695
      %v729 = vpow.pop %v728
      %v730 = vmul.f32 %v727, 1.442695
      %v731 = vpow.pop %v730
      %v732 = vadd.f32 %v712, %v729
      %v733 = vadd.f32 %v713, %v731
      %734 = vrot.lane.b32.xlu0 %v354, 1
      %v735 = vpop.permute.xlu0 %734
      %736 = vrot.lane.b32.xlu0 %v356, 1
      %v737 = vpop.permute.xlu0 %736
      %v738 = vsel %vm467, %v735, %v737
      %v739 = vsel %vm467, %v737, %v735
      %v740 = vmul.f32 %v739, %v476
      %v741 = vmul.f32 %v738, %v480
      %v742 = vmul.f32 %v729, %v740
      %v743 = vmul.f32 %v731, %v741
      %v744 = vadd.f32 %v724, %v742
      %v745 = vadd.f32 %v725, %v743
      %v746 = vsub.f32 %v522, %v664
      %v747 = vsub.f32 %v523, %v665
      %v748 = vmul.f32 %v746, 1.442695
      %v749 = vpow.pop %v748
      %v750 = vmul.f32 %v747, 1.442695
      %v751 = vpow.pop %v750
      %v752 = vadd.f32 %v732, %v749
      %v753 = vadd.f32 %v733, %v751
      %v754 = vmul.f32 %v354, %v504
      %v755 = vmul.f32 %v356, %v508
      %v756 = vmul.f32 %v749, %v754
      %v757 = vmul.f32 %v751, %v755
      %v758 = vadd.f32 %v744, %v756
      %v759 = vadd.f32 %v745, %v757
      %v760 = vsub.f32 %v557, %v664
      %v761 = vsub.f32 %v558, %v665
      %v762 = vmul.f32 %v760, 1.442695
      %v763 = vpow.pop %v762
      %v764 = vmul.f32 %v761, 1.442695
      %v765 = vpow.pop %v764
      %v766 = vadd.f32 %v752, %v763
      %v767 = vadd.f32 %v753, %v765
      %768 = vrot.lane.b32.xlu0 %v354, 127
      %v769 = vpop.permute.xlu0 %768
      %770 = vrot.lane.b32.xlu0 %v356, 127
      %v771 = vpop.permute.xlu0 %770
      %v772 = vsel %vm530, %v769, %v771
      %v773 = vsel %vm530, %v771, %v769
      %v774 = vmul.f32 %v772, %v539
      %v775 = vmul.f32 %v773, %v543
      %v776 = vmul.f32 %v763, %v774
      %v777 = vmul.f32 %v765, %v775
      %v778 = vadd.f32 %v758, %v776
      %v779 = vadd.f32 %v759, %v777
      %v780 = vsub.f32 %v592, %v664
      %v781 = vsub.f32 %v593, %v665
      %v782 = vmul.f32 %v780, 1.442695
      %v783 = vpow.pop %v782
      %v784 = vmul.f32 %v781, 1.442695
      %v785 = vpow.pop %v784
      %v786 = vadd.f32 %v766, %v783
      %v787 = vadd.f32 %v767, %v785
      %788 = vrot.lane.b32.xlu0 %v354, 113
      %v789 = vpop.permute.xlu0 %788
      %790 = vrot.lane.b32.xlu0 %v356, 113
      %v791 = vpop.permute.xlu0 %790
      %v792 = vsel %vm565, %v789, %v791
      %v793 = vsel %vm565, %v791, %v789
      %v794 = vmul.f32 %v792, %v574
      %v795 = vmul.f32 %v793, %v578
      %v796 = vmul.f32 %v783, %v794
      %v797 = vmul.f32 %v785, %v795
      %v798 = vadd.f32 %v778, %v796
      %v799 = vadd.f32 %v779, %v797
      %v800 = vsub.f32 %v627, %v664
      %v801 = vsub.f32 %v628, %v665
      %v802 = vmul.f32 %v800, 1.442695
      %v803 = vpow.pop %v802
      %v804 = vmul.f32 %v801, 1.442695
      %v805 = vpow.pop %v804
      %v806 = vadd.f32 %v786, %v803
      %v807 = vadd.f32 %v787, %v805
      %808 = vrot.lane.b32.xlu0 %v354, 112
      %v809 = vpop.permute.xlu0 %808
      %810 = vrot.lane.b32.xlu0 %v356, 112
      %v811 = vpop.permute.xlu0 %810
      %v812 = vsel %vm600, %v809, %v811
      %v813 = vsel %vm600, %v811, %v809
      %v814 = vmul.f32 %v812, %v609
      %v815 = vmul.f32 %v813, %v613
      %v816 = vmul.f32 %v803, %v814
      %v817 = vmul.f32 %v805, %v815
      %v818 = vadd.f32 %v798, %v816
      %v819 = vadd.f32 %v799, %v817
      %v820 = vsub.f32 %v662, %v664
      %v821 = vsub.f32 %v663, %v665
      %v822 = vmul.f32 %v820, 1.442695
      %v823 = vpow.pop %v822
      %v824 = vmul.f32 %v821, 1.442695
      %v825 = vpow.pop %v824
      %v826 = vadd.f32 %v806, %v823
      %v827 = vadd.f32 %v807, %v825
      %828 = vrot.lane.b32.xlu0 %v354, 111
      %v829 = vpop.permute.xlu0 %828
      %830 = vrot.lane.b32.xlu0 %v356, 111
      %v831 = vpop.permute.xlu0 %830
      %v832 = vsel %vm635, %v829, %v831
      %v833 = vsel %vm635, %v831, %v829
      %v834 = vmul.f32 %v832, %v644
      %v835 = vmul.f32 %v833, %v648
      %v836 = vmul.f32 %v823, %v834
      %v837 = vmul.f32 %v825, %v835
      %v838 = vadd.f32 %v818, %v836
      %v839 = vadd.f32 %v819, %v837
      %v840 = vrcp.pop %v826
      %v841 = vrcp.pop %v827
      %v842 = vmul.f32 %v838, %v840
      %v843 = vmul.f32 %v839, %v841
      %844 = vst [vmem:[%s258] sm:$0xff] %v842
      %845 = vst [vmem:[%s258 + $0x8] sm:$0xff] %v843
      %v846 = vadd.f32 %v842, %v843
      %847 = vadd.xlane.f32.xlu0 %v846
      %v848 = vpop.xlane.xlu0 %847
      %v849 = vmul.f32 %v842, %v842
      %v850 = vmul.f32 %v843, %v843
      %v851 = vadd.f32 %v849, %v850
      %852 = vadd.xlane.f32.xlu0 %v851
      %v853 = vpop.xlane.xlu0 %852
      %vm854 = vcmask 7168
      %v855 = vsel %vm854, %v848, %v853
      %vm856 = vcmask 15360
      %857 = vst.msk [vmem:[%s262] sm:$0xff] %vm856, %v855
      %p858 = scmp.lt.s32.totalorder %s18, 1
      %s859 = scalar_select %p858, %s18, 1
      %s860 = smul.addr %s859, 2
      %s861 = smul.addr %s860, 8
      %s862 = scalar_lea.vmem %s5, %s861
      %p863 = scmp.lt.s32.totalorder %s18, 1
      %s864 = scalar_select %p863, %s18, 1
      %s865 = smul.addr %s864, 8
      %s866 = scalar_lea.vmem %s6, %s865
      // Predicated region
      $region41: #{self_attention_residual_block.6} parent=39 // pred_check
        %p867 = pneg %p146
      $region42: #{self_attention_residual_block.6} parent=39 // pred_check_branch
        %869 = sbr.rel (%p867) target = $region44
      $region43: #{self_attention_residual_block.6} parent=39 // pred_region
        _
      $region44: #{self_attention_residual_block.6} parent=39 // pred_fallthru
        _
      // Predicated region
      $region45: #{self_attention_residual_block.6} parent=39 // pred_check
        %p870 = pneg %p172
      $region46: #{self_attention_residual_block.6} parent=39 // pred_check_branch
        %872 = sbr.rel (%p870) target = $region48
      $region47: #{self_attention_residual_block.6} parent=39 // pred_region
        _
      $region48: #{self_attention_residual_block.6} parent=39 // pred_fallthru
        _
    $region40: #{self_attention_residual_block.6} parent=5 // pred_fallthru
      _
    %p873 = scmp.le.s32.totalorder 2, %s13
    // Predicated region
    $region49: #{self_attention_residual_block.6} parent=5 // pred_check
      %p874 = pneg %p873
    $region50: #{self_attention_residual_block.6} parent=5 // pred_check_branch
      %876 = sbr.rel (%p874) target = $region52
    $region51: #{self_attention_residual_block.6} parent=5 // pred_region
      %s877 = ssub.s32 %s13, 2
      // Predicated region
      $region53: #{self_attention_residual_block.6} parent=51 // pred_check
        %p878 = pneg %p152
      $region54: #{self_attention_residual_block.6} parent=51 // pred_check_branch
        %880 = sbr.rel (%p878) target = $region56
      $region55: #{self_attention_residual_block.6} parent=51 // pred_region
        %p881 = scmp.lt.s32.totalorder %s19, 1
        %s882 = scalar_select %p881, %s19, 1
        %s883 = smul.addr %s882, 2
        %s884 = smul.addr %s883, 8
        %s885 = scalar_lea.vmem %s5, %s884
      $region56: #{self_attention_residual_block.6} parent=51 // pred_fallthru
        _
      // Predicated region
      $region57: #{self_attention_residual_block.6} parent=51 // pred_check
        %p886 = pneg %p178
      $region58: #{self_attention_residual_block.6} parent=51 // pred_check_branch
        %888 = sbr.rel (%p886) target = $region60
      $region59: #{self_attention_residual_block.6} parent=51 // pred_region
        %p889 = scmp.lt.s32.totalorder %s19, 1
        %s890 = scalar_select %p889, %s19, 1
        %s891 = smul.addr %s890, 8
        %s892 = scalar_lea.vmem %s6, %s891
      $region60: #{self_attention_residual_block.6} parent=51 // pred_fallthru
        _
    $region52: #{self_attention_residual_block.6} parent=5 // pred_fallthru
      _
  $region6: #{self_attention_residual_block.6} parent=0 // loop_footer
    %s17 = sadd.s32 1, %s13
  $region7: #{self_attention_residual_block.6} parent=0 // loop_footer_branch
    %12 = sbr.rel target = $region3
  $region8: #{self_attention_residual_block.6} parent=0 // loop_exit
    _

</llo_original>
